<compile_context>
chip_gen: v5e
topology: v5e:2x2
jax: 0.10.0
libtpu: 0.0.40
codegen_flags: <defaults>
</compile_context>

<pallas_src>
import functools

import jax
import jax.numpy as jnp
from jax.experimental import pallas as pl
from jax.experimental.pallas import tpu as pltpu


# ---------------------------------------------------------------------------
# precision policy + math helpers (shared by kernels and pure-JAX reference)
# ---------------------------------------------------------------------------
MATMUL_DTYPE = jnp.bfloat16   # set to jnp.float32 for strict f32 PyTorch parity


def _mm(a, b):
    """Matmul with operands in MATMUL_DTYPE, f32 accumulation."""
    return jnp.dot(a.astype(MATMUL_DTYPE), b.astype(MATMUL_DTYPE),
                   preferred_element_type=jnp.float32)


def _bmm(eq, a, b):
    """Batched einsum with operands in MATMUL_DTYPE, f32 accumulation."""
    return jnp.einsum(eq, a.astype(MATMUL_DTYPE), b.astype(MATMUL_DTYPE),
                      preferred_element_type=jnp.float32)


def _layer_norm(x, g, b, eps=1e-5):
    mean = jnp.mean(x, axis=-1, keepdims=True)
    var = jnp.mean(jnp.square(x - mean), axis=-1, keepdims=True)
    return (x - mean) * jax.lax.rsqrt(var + eps) * g + b


def _gelu_exact(x):
    # nn.GELU() default in PyTorch = exact erf-based GELU
    return 0.5 * x * (1.0 + jax.lax.erf(x * jnp.float32(0.7071067811865476)))


def _ffn_ln_res(h1, ln2_g, ln2_b, w1_t, b1, w2_t, b2):
    """LayerNorm -> Linear -> GELU -> Linear -> residual (weights pre-transposed)."""
    ff = _layer_norm(h1, ln2_g, ln2_b)
    ff = _gelu_exact(_mm(ff, w1_t) + b1)
    ff = _mm(ff, w2_t) + b2
    return h1 + ff


# ---------------------------------------------------------------------------
# Pallas kernels: FULL layer stack, one grid step, in-kernel layer loop
# ---------------------------------------------------------------------------
def _ca_stack_self_kernel(x_ref, w_qkv_ref, b_qkv_ref, w_o_ref, w_f1_ref,
                          w_f2_ref, vecs_ref, out_ref, *, n_heads, B, S):
    C = x_ref.shape[-1]
    D = C // n_heads
    L = w_o_ref.shape[0]
    N = B * S

    cur = x_ref[...]                                   # [N, C] f32, value-resident
    # Statically unrolled layer loop (L is small).  For deep stacks prefer
    # lax.fori_loop(unroll=True) or grid=(L,) to bound live ranges / pipeline
    # per-layer weight DMAs.
    for l in range(L):
        vec = vecs_ref[l]                              # [8, C] packed small vectors
        ln1_g, ln1_b = vec[0:1], vec[1:2]
        ln2_g, ln2_b = vec[2:3], vec[3:4]
        bo, b1, b2 = vec[4:5], vec[5:6], vec[6:7]
        w_qkv = w_qkv_ref[l]                           # [C, 3C] bf16 (q-scale folded in)
        b_qkv = b_qkv_ref[l]                           # [1, 3C] f32  (q-scale folded in)
        w_o, w_f1, w_f2 = w_o_ref[l], w_f1_ref[l], w_f2_ref[l]

        x_ln = _layer_norm(cur, ln1_g, ln1_b)
        qkv = _mm(x_ln, w_qkv) + b_qkv                 # [N, 3C] single packed projection
        q, k, v = qkv[:, :C], qkv[:, C:2 * C], qkv[:, 2 * C:]

        head_outs = []
        for h in range(n_heads):                       # static head loop, batched over B
            hd = slice(h * D, (h + 1) * D)
            qh = q[:, hd].reshape(B, S, D)
            kh = k[:, hd].reshape(B, S, D)
            vh = v[:, hd].reshape(B, S, D)
            s = _bmm('bqd,bkd->bqk', qh, kh)           # [B, S, S]
            s = s - jnp.max(s, axis=-1, keepdims=True)
            e = jnp.exp(s)
            p = e / jnp.sum(e, axis=-1, keepdims=True)  # exact softmax
            head_outs.append(_bmm('bqk,bkd->bqd', p, vh))   # [B, S, D]
        o = jnp.concatenate(head_outs, axis=-1).reshape(N, C)
        attn = _mm(o, w_o) + bo                        # ONE full-C output projection

        h1 = cur + attn                                # residual 1
        cur = _ffn_ln_res(h1, ln2_g, ln2_b, w_f1, b1, w_f2, b2)  # residual 2

    out_ref[...] = cur                                 # single output store


def _ca_stack_cross_kernel(x_ref, cond_ref, w_v_ref, w_o_ref, w_f1_ref,
                           w_f2_ref, vecs_ref, out_ref, *, B, S):
    C = x_ref.shape[-1]
    L = w_o_ref.shape[0]
    N = B * S

    cur = x_ref[...]                                   # [N, C]
    cond = cond_ref[...]                               # [B, C]
    for l in range(L):
        vec = vecs_ref[l]                              # [8, C]
        ln2_g, ln2_b = vec[0:1], vec[1:2]
        bv, bo, b1, b2 = vec[2:3], vec[3:4], vec[4:5], vec[5:6]
        w_v, w_o, w_f1, w_f2 = w_v_ref[l], w_o_ref[l], w_f1_ref[l], w_f2_ref[l]

        # S_kv == 1 specialization: softmax over a single key is exactly 1.0, so
        # the attention output for every query token is the out-projected V
        # token; LN1 / Q / K projections are mathematically dead and skipped.
        v_tok = _mm(cond, w_v) + bv                    # [B, C]
        attn = _mm(v_tok, w_o) + bo                    # [B, C]

        h1 = (cur.reshape(B, S, C) + attn[:, None, :]).reshape(N, C)
        cur = _ffn_ln_res(h1, ln2_g, ln2_b, w_f1, b1, w_f2, b2)

    out_ref[...] = cur


# ---------------------------------------------------------------------------
# host-side parameter packing (transpose, q-scale fold, bf16 cast, concat)
# ---------------------------------------------------------------------------
def _pack_layers(layers, has_cond, n_heads):
    C = layers[0]["wq"].shape[0]
    scale = jnp.float32(1.0 / ((C // n_heads) ** 0.5))
    wdt = MATMUL_DTYPE
    zero = jnp.zeros((1, C), jnp.float32)
    w_o_t = jnp.stack([lp["wo"].T for lp in layers]).astype(wdt)    # [L, C, C]
    w_f1_t = jnp.stack([lp["w1"].T for lp in layers]).astype(wdt)   # [L, C, C]
    w_f2_t = jnp.stack([lp["w2"].T for lp in layers]).astype(wdt)   # [L, C, C]
    if has_cond:
        w_v_t = jnp.stack([lp["wv"].T for lp in layers]).astype(wdt)
        vecs = jnp.stack([
            jnp.concatenate([lp["ln2_g"], lp["ln2_b"], lp["bv"], lp["bo"],
                             lp["b1"], lp["b2"], zero, zero], axis=0)
            for lp in layers])                                       # [L, 8, C]
        return dict(w_v_t=w_v_t, w_o_t=w_o_t, w_f1_t=w_f1_t, w_f2_t=w_f2_t,
                    vecs=vecs)
    # fold the 1/sqrt(D) attention scale into the packed q weights and bias
    w_qkv_t = jnp.stack([
        jnp.concatenate([lp["wq"].T * scale, lp["wk"].T, lp["wv"].T], axis=1)
        for lp in layers]).astype(wdt)                               # [L, C, 3C]
    b_qkv = jnp.stack([
        jnp.concatenate([lp["bq"] * scale, lp["bk"], lp["bv"]], axis=1)
        for lp in layers])                                           # [L, 1, 3C] f32
    vecs = jnp.stack([
        jnp.concatenate([lp["ln1_g"], lp["ln1_b"], lp["ln2_g"], lp["ln2_b"],
                         lp["bo"], lp["b1"], lp["b2"], zero], axis=0)
        for lp in layers])                                           # [L, 8, C]
    return dict(w_qkv_t=w_qkv_t, b_qkv=b_qkv, w_o_t=w_o_t, w_f1_t=w_f1_t,
                w_f2_t=w_f2_t, vecs=vecs)


def _ca_stack_pallas(x_bsc, cond_bc, layers, n_heads):
    """x_bsc: [B, S, C] f32; cond_bc: None or [B, C] f32 (already projected)."""
    B, S, C = x_bsc.shape
    N = B * S
    x2 = x_bsc.reshape(N, C)
    has_cond = cond_bc is not None
    packed = _pack_layers(layers, has_cond, n_heads)

    fix2 = lambda i: (0, 0)
    fix3 = lambda i: (0, 0, 0)

    if has_cond:
        kernel = functools.partial(_ca_stack_cross_kernel, B=B, S=S)
        inputs = [x2, cond_bc, packed["w_v_t"], packed["w_o_t"],
                  packed["w_f1_t"], packed["w_f2_t"], packed["vecs"]]
        in_specs = [pl.BlockSpec(x2.shape, fix2),
                    pl.BlockSpec(cond_bc.shape, fix2),
                    pl.BlockSpec(packed["w_v_t"].shape, fix3),
                    pl.BlockSpec(packed["w_o_t"].shape, fix3),
                    pl.BlockSpec(packed["w_f1_t"].shape, fix3),
                    pl.BlockSpec(packed["w_f2_t"].shape, fix3),
                    pl.BlockSpec(packed["vecs"].shape, fix3)]
    else:
        kernel = functools.partial(_ca_stack_self_kernel, n_heads=n_heads, B=B, S=S)
        inputs = [x2, packed["w_qkv_t"], packed["b_qkv"], packed["w_o_t"],
                  packed["w_f1_t"], packed["w_f2_t"], packed["vecs"]]
        in_specs = [pl.BlockSpec(x2.shape, fix2),
                    pl.BlockSpec(packed["w_qkv_t"].shape, fix3),
                    pl.BlockSpec(packed["b_qkv"].shape, fix3),
                    pl.BlockSpec(packed["w_o_t"].shape, fix3),
                    pl.BlockSpec(packed["w_f1_t"].shape, fix3),
                    pl.BlockSpec(packed["w_f2_t"].shape, fix3),
                    pl.BlockSpec(packed["vecs"].shape, fix3)]

    # explicit VMEM budget: raw bytes of everything resident + generous padding
    # slack, clamped to stay inside every generation's physical VMEM.
    raw_bytes = sum(int(a.size) * a.dtype.itemsize for a in inputs) + N * C * 4
    vmem_limit = int(min(100 * 2**20, max(32 * 2**20, 4 * raw_bytes)))

    out2 = pl.pallas_call(
        kernel,
        out_shape=jax.ShapeDtypeStruct((N, C), jnp.float32),
        grid=(1,),
        in_specs=in_specs,
        out_specs=pl.BlockSpec((N, C), fix2),
        compiler_params=pltpu.CompilerParams(
            dimension_semantics=("arbitrary",),
            vmem_limit_bytes=vmem_limit),
    )(*inputs)
    return out2.reshape(B, S, C)


# ---------------------------------------------------------------------------
# pure-JAX reference (raw per-layer params, identical precision policy)
# ---------------------------------------------------------------------------
def _ca_stack_ref(x, cond_bc, layers, n_heads):
    B, S, C = x.shape
    D = C // n_heads
    scale = jnp.float32(1.0 / (D ** 0.5))
    cond_tok = None if cond_bc is None else cond_bc[:, None, :]
    for lp in layers:
        x_ln = _layer_norm(x, lp["ln1_g"][0], lp["ln1_b"][0])
        kv = x_ln if cond_tok is None else cond_tok
        S_kv = kv.shape[1]
        q = _mm(x_ln, lp["wq"].T * scale) + lp["bq"][0] * scale
        k = _mm(kv, lp["wk"].T) + lp["bk"][0]
        v = _mm(kv, lp["wv"].T) + lp["bv"][0]
        qh = q.reshape(B, S, n_heads, D)
        kh = k.reshape(B, S_kv, n_heads, D)
        vh = v.reshape(B, S_kv, n_heads, D)
        s = _bmm("bqhd,bkhd->bhqk", qh, kh)
        p = jax.nn.softmax(s, axis=-1)
        o = _bmm("bhqk,bkhd->bqhd", p, vh).reshape(B, S, C)
        attn = _mm(o, lp["wo"].T) + lp["bo"][0]
        h1 = attn + x
        x = _ffn_ln_res(h1, lp["ln2_g"][0], lp["ln2_b"][0],
                        lp["w1"].T, lp["b1"][0], lp["w2"].T, lp["b2"][0])
    return x


# ---------------------------------------------------------------------------
# CAWrapper forward
# ---------------------------------------------------------------------------
def ca_wrapper_forward(x_nchw, params, n_heads, cond=None, use_pallas=True):
    """x_nchw: [B, C, size, size] (PyTorch NCHW); cond: None or [B, d_cond]."""
    B, C, H, W = x_nchw.shape
    x = x_nchw.reshape(B, C, H * W).swapaxes(1, 2)          # -> [B, S, C]
    cond_proj = None
    if cond is not None:
        # CAWrapper only ever builds a single context token (cond.unsqueeze(1));
        # the kernel's S_kv==1 specialization relies on this.
        assert cond.ndim == 2 and cond.shape[0] == B, \
            "cond must be [B, d_cond] (single context token)"
        cond_proj = cond @ params["cond_w"].T + params["cond_b"]   # tiny JAX glue
    if use_pallas:
        x = _ca_stack_pallas(x, cond_proj, params["layers"], n_heads)
    else:
        x = _ca_stack_ref(x, cond_proj, params["layers"], n_heads)
    return x.swapaxes(1, 2).reshape(B, C, H, W)


# ---------------------------------------------------------------------------
# deterministic parameter init (synthetic, not a checkpoint load)
# ---------------------------------------------------------------------------
def init_params(key, channels, n_layers, d_cond=None):
    def nrm(k, shape, scale=0.08):
        return (jax.random.normal(k, shape, jnp.float32) * scale).astype(jnp.float32)

    keys = jax.random.split(key, n_layers + 1)
    layers = []
    for i in range(n_layers):
        ks = jax.random.split(keys[i], 12)
        layers.append(dict(
            ln1_g=jnp.ones((1, channels), jnp.float32),
            ln1_b=jnp.zeros((1, channels), jnp.float32),
            wq=nrm(ks[0], (channels, channels)), bq=nrm(ks[1], (1, channels), 0.02),
            wk=nrm(ks[2], (channels, channels)), bk=nrm(ks[3], (1, channels), 0.02),
            wv=nrm(ks[4], (channels, channels)), bv=nrm(ks[5], (1, channels), 0.02),
            wo=nrm(ks[6], (channels, channels)), bo=nrm(ks[7], (1, channels), 0.02),
            ln2_g=jnp.ones((1, channels), jnp.float32),
            ln2_b=jnp.zeros((1, channels), jnp.float32),
            w1=nrm(ks[8], (channels, channels)), b1=nrm(ks[9], (1, channels), 0.02),
            w2=nrm(ks[10], (channels, channels)), b2=nrm(ks[11], (1, channels), 0.02),
        ))
    params = {"layers": layers}
    if d_cond is not None:
        kc1, kc2 = jax.random.split(keys[-1])
        params["cond_w"] = nrm(kc1, (channels, d_cond))
        params["cond_b"] = nrm(kc2, (channels,), 0.02)
    return params


if __name__ == "__main__":
    B, channels, size = 2, 32, 8          # S = 64 tokens, B*S = 128 rows
    n_heads, n_layers, d_cond = 4, 2, 16

    key = jax.random.PRNGKey(0)
    k_x, k_c, k_p = jax.random.split(key, 3)
    x = jax.random.normal(k_x, (B, channels, size, size), jnp.float32)
    cond = jax.random.normal(k_c, (B, d_cond), jnp.float32)
    params = init_params(k_p, channels, n_layers, d_cond=d_cond)

    # cross-attention path (cond provided, single context token per sample)
    out_cross = jax.block_until_ready(
        ca_wrapper_forward(x, params, n_heads, cond=cond, use_pallas=True))
    ref_cross = ca_wrapper_forward(x, params, n_heads, cond=cond, use_pallas=False)

    # self-attention path (cond is None)
    out_self = jax.block_until_ready(
        ca_wrapper_forward(x, params, n_heads, cond=None, use_pallas=True))
    ref_self = ca_wrapper_forward(x, params, n_heads, cond=None, use_pallas=False)

    assert out_cross.shape == (B, channels, size, size)
    assert out_self.shape == (B, channels, size, size)
    assert jnp.allclose(out_cross, ref_cross, atol=2e-3, rtol=2e-3), "cross-attn mismatch"
    assert jnp.allclose(out_self, ref_self, atol=2e-3, rtol=2e-3), "self-attn mismatch"

    print("KERNEL_OK")
</pallas_src>

<mosaic_0001>
module attributes {stable_mosaic.version = 11 : i64} {
  func.func @_ca_stack_cross_kernel(%arg0: i32, %arg1: memref<128x32xf32, #tpu.memory_space<vmem>>, %arg2: memref<2x32xf32, #tpu.memory_space<vmem>>, %arg3: memref<2x32x32xbf16, #tpu.memory_space<vmem>>, %arg4: memref<2x32x32xbf16, #tpu.memory_space<vmem>>, %arg5: memref<2x32x32xbf16, #tpu.memory_space<vmem>>, %arg6: memref<2x32x32xbf16, #tpu.memory_space<vmem>>, %arg7: memref<2x8x32xf32, #tpu.memory_space<vmem>>, %arg8: memref<128x32xf32, #tpu.memory_space<vmem>>) attributes {dimension_semantics = [#tpu.dimension_semantics<arbitrary>], iteration_bounds = array<i64: 1>, scalar_prefetch = 0 : i64, scratch_operands = 0 : i64, tpu.core_type = #tpu.core_type<tc>, window_params = [{pipeline_mode = #tpu.pipeline_mode<synchronous>, transform_indices = @transform_0, window_bounds = array<i64: 128, 32>}, {pipeline_mode = #tpu.pipeline_mode<synchronous>, transform_indices = @transform_1, window_bounds = array<i64: 2, 32>}, {pipeline_mode = #tpu.pipeline_mode<synchronous>, transform_indices = @transform_2, window_bounds = array<i64: 2, 32, 32>}, {pipeline_mode = #tpu.pipeline_mode<synchronous>, transform_indices = @transform_3, window_bounds = array<i64: 2, 32, 32>}, {pipeline_mode = #tpu.pipeline_mode<synchronous>, transform_indices = @transform_4, window_bounds = array<i64: 2, 32, 32>}, {pipeline_mode = #tpu.pipeline_mode<synchronous>, transform_indices = @transform_5, window_bounds = array<i64: 2, 32, 32>}, {pipeline_mode = #tpu.pipeline_mode<synchronous>, transform_indices = @transform_6, window_bounds = array<i64: 2, 8, 32>}, {pipeline_mode = #tpu.pipeline_mode<synchronous>, transform_indices = @transform_7, window_bounds = array<i64: 128, 32>}]} {
    %c0 = arith.constant 0 : index
    %c0_0 = arith.constant 0 : index
    %0 = vector.load %arg1[%c0, %c0_0] : memref<128x32xf32, #tpu.memory_space<vmem>>, vector<128x32xf32>
    %c0_1 = arith.constant 0 : index
    %c0_2 = arith.constant 0 : index
    %1 = vector.load %arg2[%c0_1, %c0_2] : memref<2x32xf32, #tpu.memory_space<vmem>>, vector<2x32xf32>
    %c0_3 = arith.constant 0 : index
    %c0_4 = arith.constant 0 : index
    %c0_5 = arith.constant 0 : index
    %2 = vector.load %arg7[%c0_3, %c0_4, %c0_5] : memref<2x8x32xf32, #tpu.memory_space<vmem>>, vector<1x8x32xf32>
    %3 = vector.shape_cast %2 : vector<1x8x32xf32> to vector<8x32xf32>
    %4 = vector.extract_strided_slice %3 {offsets = [0, 0], sizes = [1, 32], strides = [1, 1]} : vector<8x32xf32> to vector<1x32xf32>
    %5 = vector.extract_strided_slice %3 {offsets = [1, 0], sizes = [1, 32], strides = [1, 1]} : vector<8x32xf32> to vector<1x32xf32>
    %6 = vector.extract_strided_slice %3 {offsets = [2, 0], sizes = [1, 32], strides = [1, 1]} : vector<8x32xf32> to vector<1x32xf32>
    %7 = vector.extract_strided_slice %3 {offsets = [3, 0], sizes = [1, 32], strides = [1, 1]} : vector<8x32xf32> to vector<1x32xf32>
    %8 = vector.extract_strided_slice %3 {offsets = [4, 0], sizes = [1, 32], strides = [1, 1]} : vector<8x32xf32> to vector<1x32xf32>
    %9 = vector.extract_strided_slice %3 {offsets = [5, 0], sizes = [1, 32], strides = [1, 1]} : vector<8x32xf32> to vector<1x32xf32>
    %c0_6 = arith.constant 0 : index
    %c0_7 = arith.constant 0 : index
    %c0_8 = arith.constant 0 : index
    %10 = vector.load %arg3[%c0_6, %c0_7, %c0_8] : memref<2x32x32xbf16, #tpu.memory_space<vmem>>, vector<1x32x32xbf16>
    %11 = vector.shape_cast %10 : vector<1x32x32xbf16> to vector<32x32xbf16>
    %c0_9 = arith.constant 0 : index
    %c0_10 = arith.constant 0 : index
    %c0_11 = arith.constant 0 : index
    %12 = vector.load %arg4[%c0_9, %c0_10, %c0_11] : memref<2x32x32xbf16, #tpu.memory_space<vmem>>, vector<1x32x32xbf16>
    %13 = vector.shape_cast %12 : vector<1x32x32xbf16> to vector<32x32xbf16>
    %c0_12 = arith.constant 0 : index
    %c0_13 = arith.constant 0 : index
    %c0_14 = arith.constant 0 : index
    %14 = vector.load %arg5[%c0_12, %c0_13, %c0_14] : memref<2x32x32xbf16, #tpu.memory_space<vmem>>, vector<1x32x32xbf16>
    %15 = vector.shape_cast %14 : vector<1x32x32xbf16> to vector<32x32xbf16>
    %c0_15 = arith.constant 0 : index
    %c0_16 = arith.constant 0 : index
    %c0_17 = arith.constant 0 : index
    %16 = vector.load %arg6[%c0_15, %c0_16, %c0_17] : memref<2x32x32xbf16, #tpu.memory_space<vmem>>, vector<1x32x32xbf16>
    %17 = vector.shape_cast %16 : vector<1x32x32xbf16> to vector<32x32xbf16>
    %18 = arith.truncf %1 : vector<2x32xf32> to vector<2x32xbf16>
    %cst = arith.constant dense<0.000000e+00> : vector<2x32xf32>
    %19 = tpu.matmul %18, %11, %cst {dimension_numbers = #tpu.dot_dimension_numbers<[1], [0], [0], [1], [0, 0, 1, 1], [], []>} : vector<2x32xbf16>, vector<32x32xbf16>, vector<2x32xf32> -> vector<2x32xf32>
    %20 = vector.broadcast %6 : vector<1x32xf32> to vector<2x32xf32>
    %21 = arith.addf %19, %20 : vector<2x32xf32>
    %22 = arith.truncf %21 : vector<2x32xf32> to vector<2x32xbf16>
    %cst_18 = arith.constant dense<0.000000e+00> : vector<2x32xf32>
    %23 = tpu.matmul %22, %13, %cst_18 {dimension_numbers = #tpu.dot_dimension_numbers<[1], [0], [0], [1], [0, 0, 1, 1], [], []>} : vector<2x32xbf16>, vector<32x32xbf16>, vector<2x32xf32> -> vector<2x32xf32>
    %24 = vector.broadcast %7 : vector<1x32xf32> to vector<2x32xf32>
    %25 = arith.addf %23, %24 : vector<2x32xf32>
    %26 = vector.shape_cast %0 : vector<128x32xf32> to vector<2x64x32xf32>
    %27 = vector.shape_cast %25 : vector<2x32xf32> to vector<2x1x32xf32>
    %28 = vector.broadcast %27 : vector<2x1x32xf32> to vector<2x64x32xf32>
    %29 = arith.addf %26, %28 : vector<2x64x32xf32>
    %30 = vector.shape_cast %29 : vector<2x64x32xf32> to vector<128x32xf32>
    %cst_19 = arith.constant dense<0.000000e+00> : vector<128xf32>
    %31 = vector.multi_reduction <add>, %30, %cst_19 [1] : vector<128x32xf32> to vector<128xf32>
    %32 = vector.shape_cast %31 : vector<128xf32> to vector<128x1xf32>
    %cst_20 = arith.constant 3.200000e+01 : f32
    %33 = vector.broadcast %cst_20 : f32 to vector<128x1xf32>
    %34 = arith.divf %32, %33 : vector<128x1xf32>
    %35 = vector.broadcast %34 : vector<128x1xf32> to vector<128x32xf32>
    %36 = arith.subf %30, %35 : vector<128x32xf32>
    %37 = arith.mulf %36, %36 : vector<128x32xf32>
    %cst_21 = arith.constant dense<0.000000e+00> : vector<128xf32>
    %38 = vector.multi_reduction <add>, %37, %cst_21 [1] : vector<128x32xf32> to vector<128xf32>
    %39 = vector.shape_cast %38 : vector<128xf32> to vector<128x1xf32>
    %cst_22 = arith.constant 3.200000e+01 : f32
    %40 = vector.broadcast %cst_22 : f32 to vector<128x1xf32>
    %41 = arith.divf %39, %40 : vector<128x1xf32>
    %42 = vector.broadcast %34 : vector<128x1xf32> to vector<128x32xf32>
    %43 = arith.subf %30, %42 : vector<128x32xf32>
    %cst_23 = arith.constant 9.99999974E-6 : f32
    %44 = vector.broadcast %cst_23 : f32 to vector<128x1xf32>
    %45 = arith.addf %41, %44 : vector<128x1xf32>
    %46 = math.rsqrt %45 : vector<128x1xf32>
    %47 = vector.broadcast %46 : vector<128x1xf32> to vector<128x32xf32>
    %48 = arith.mulf %43, %47 : vector<128x32xf32>
    %49 = vector.broadcast %4 : vector<1x32xf32> to vector<128x32xf32>
    %50 = arith.mulf %48, %49 : vector<128x32xf32>
    %51 = vector.broadcast %5 : vector<1x32xf32> to vector<128x32xf32>
    %52 = arith.addf %50, %51 : vector<128x32xf32>
    %53 = arith.truncf %52 : vector<128x32xf32> to vector<128x32xbf16>
    %cst_24 = arith.constant dense<0.000000e+00> : vector<128x32xf32>
    %54 = tpu.matmul %53, %15, %cst_24 {dimension_numbers = #tpu.dot_dimension_numbers<[1], [0], [0], [1], [0, 0, 1, 1], [], []>} : vector<128x32xbf16>, vector<32x32xbf16>, vector<128x32xf32> -> vector<128x32xf32>
    %55 = vector.broadcast %8 : vector<1x32xf32> to vector<128x32xf32>
    %56 = arith.addf %54, %55 : vector<128x32xf32>
    %cst_25 = arith.constant 5.000000e-01 : f32
    %57 = vector.broadcast %cst_25 : f32 to vector<128x32xf32>
    %58 = arith.mulf %57, %56 : vector<128x32xf32>
    %cst_26 = arith.constant 0.707106769 : f32
    %59 = vector.broadcast %cst_26 : f32 to vector<128x32xf32>
    %60 = arith.mulf %56, %59 : vector<128x32xf32>
    %61 = math.erf %60 : vector<128x32xf32>
    %cst_27 = arith.constant 1.000000e+00 : f32
    %62 = vector.broadcast %cst_27 : f32 to vector<128x32xf32>
    %63 = arith.addf %62, %61 : vector<128x32xf32>
    %64 = arith.mulf %58, %63 : vector<128x32xf32>
    %65 = arith.truncf %64 : vector<128x32xf32> to vector<128x32xbf16>
    %cst_28 = arith.constant dense<0.000000e+00> : vector<128x32xf32>
    %66 = tpu.matmul %65, %17, %cst_28 {dimension_numbers = #tpu.dot_dimension_numbers<[1], [0], [0], [1], [0, 0, 1, 1], [], []>} : vector<128x32xbf16>, vector<32x32xbf16>, vector<128x32xf32> -> vector<128x32xf32>
    %67 = vector.broadcast %9 : vector<1x32xf32> to vector<128x32xf32>
    %68 = arith.addf %66, %67 : vector<128x32xf32>
    %69 = arith.addf %30, %68 : vector<128x32xf32>
    %c1 = arith.constant 1 : index
    %c0_29 = arith.constant 0 : index
    %c0_30 = arith.constant 0 : index
    %70 = vector.load %arg7[%c1, %c0_29, %c0_30] : memref<2x8x32xf32, #tpu.memory_space<vmem>>, vector<1x8x32xf32>
    %71 = vector.shape_cast %70 : vector<1x8x32xf32> to vector<8x32xf32>
    %72 = vector.extract_strided_slice %71 {offsets = [0, 0], sizes = [1, 32], strides = [1, 1]} : vector<8x32xf32> to vector<1x32xf32>
    %73 = vector.extract_strided_slice %71 {offsets = [1, 0], sizes = [1, 32], strides = [1, 1]} : vector<8x32xf32> to vector<1x32xf32>
    %74 = vector.extract_strided_slice %71 {offsets = [2, 0], sizes = [1, 32], strides = [1, 1]} : vector<8x32xf32> to vector<1x32xf32>
    %75 = vector.extract_strided_slice %71 {offsets = [3, 0], sizes = [1, 32], strides = [1, 1]} : vector<8x32xf32> to vector<1x32xf32>
    %76 = vector.extract_strided_slice %71 {offsets = [4, 0], sizes = [1, 32], strides = [1, 1]} : vector<8x32xf32> to vector<1x32xf32>
    %77 = vector.extract_strided_slice %71 {offsets = [5, 0], sizes = [1, 32], strides = [1, 1]} : vector<8x32xf32> to vector<1x32xf32>
    %c1_31 = arith.constant 1 : index
    %c0_32 = arith.constant 0 : index
    %c0_33 = arith.constant 0 : index
    %78 = vector.load %arg3[%c1_31, %c0_32, %c0_33] : memref<2x32x32xbf16, #tpu.memory_space<vmem>>, vector<1x32x32xbf16>
    %79 = vector.shape_cast %78 : vector<1x32x32xbf16> to vector<32x32xbf16>
    %c1_34 = arith.constant 1 : index
    %c0_35 = arith.constant 0 : index
    %c0_36 = arith.constant 0 : index
    %80 = vector.load %arg4[%c1_34, %c0_35, %c0_36] : memref<2x32x32xbf16, #tpu.memory_space<vmem>>, vector<1x32x32xbf16>
    %81 = vector.shape_cast %80 : vector<1x32x32xbf16> to vector<32x32xbf16>
    %c1_37 = arith.constant 1 : index
    %c0_38 = arith.constant 0 : index
    %c0_39 = arith.constant 0 : index
    %82 = vector.load %arg5[%c1_37, %c0_38, %c0_39] : memref<2x32x32xbf16, #tpu.memory_space<vmem>>, vector<1x32x32xbf16>
    %83 = vector.shape_cast %82 : vector<1x32x32xbf16> to vector<32x32xbf16>
    %c1_40 = arith.constant 1 : index
    %c0_41 = arith.constant 0 : index
    %c0_42 = arith.constant 0 : index
    %84 = vector.load %arg6[%c1_40, %c0_41, %c0_42] : memref<2x32x32xbf16, #tpu.memory_space<vmem>>, vector<1x32x32xbf16>
    %85 = vector.shape_cast %84 : vector<1x32x32xbf16> to vector<32x32xbf16>
    %86 = arith.truncf %1 : vector<2x32xf32> to vector<2x32xbf16>
    %cst_43 = arith.constant dense<0.000000e+00> : vector<2x32xf32>
    %87 = tpu.matmul %86, %79, %cst_43 {dimension_numbers = #tpu.dot_dimension_numbers<[1], [0], [0], [1], [0, 0, 1, 1], [], []>} : vector<2x32xbf16>, vector<32x32xbf16>, vector<2x32xf32> -> vector<2x32xf32>
    %88 = vector.broadcast %74 : vector<1x32xf32> to vector<2x32xf32>
    %89 = arith.addf %87, %88 : vector<2x32xf32>
    %90 = arith.truncf %89 : vector<2x32xf32> to vector<2x32xbf16>
    %cst_44 = arith.constant dense<0.000000e+00> : vector<2x32xf32>
    %91 = tpu.matmul %90, %81, %cst_44 {dimension_numbers = #tpu.dot_dimension_numbers<[1], [0], [0], [1], [0, 0, 1, 1], [], []>} : vector<2x32xbf16>, vector<32x32xbf16>, vector<2x32xf32> -> vector<2x32xf32>
    %92 = vector.broadcast %75 : vector<1x32xf32> to vector<2x32xf32>
    %93 = arith.addf %91, %92 : vector<2x32xf32>
    %94 = vector.shape_cast %69 : vector<128x32xf32> to vector<2x64x32xf32>
    %95 = vector.shape_cast %93 : vector<2x32xf32> to vector<2x1x32xf32>
    %96 = vector.broadcast %95 : vector<2x1x32xf32> to vector<2x64x32xf32>
    %97 = arith.addf %94, %96 : vector<2x64x32xf32>
    %98 = vector.shape_cast %97 : vector<2x64x32xf32> to vector<128x32xf32>
    %cst_45 = arith.constant dense<0.000000e+00> : vector<128xf32>
    %99 = vector.multi_reduction <add>, %98, %cst_45 [1] : vector<128x32xf32> to vector<128xf32>
    %100 = vector.shape_cast %99 : vector<128xf32> to vector<128x1xf32>
    %cst_46 = arith.constant 3.200000e+01 : f32
    %101 = vector.broadcast %cst_46 : f32 to vector<128x1xf32>
    %102 = arith.divf %100, %101 : vector<128x1xf32>
    %103 = vector.broadcast %102 : vector<128x1xf32> to vector<128x32xf32>
    %104 = arith.subf %98, %103 : vector<128x32xf32>
    %105 = arith.mulf %104, %104 : vector<128x32xf32>
    %cst_47 = arith.constant dense<0.000000e+00> : vector<128xf32>
    %106 = vector.multi_reduction <add>, %105, %cst_47 [1] : vector<128x32xf32> to vector<128xf32>
    %107 = vector.shape_cast %106 : vector<128xf32> to vector<128x1xf32>
    %cst_48 = arith.constant 3.200000e+01 : f32
    %108 = vector.broadcast %cst_48 : f32 to vector<128x1xf32>
    %109 = arith.divf %107, %108 : vector<128x1xf32>
    %110 = vector.broadcast %102 : vector<128x1xf32> to vector<128x32xf32>
    %111 = arith.subf %98, %110 : vector<128x32xf32>
    %cst_49 = arith.constant 9.99999974E-6 : f32
    %112 = vector.broadcast %cst_49 : f32 to vector<128x1xf32>
    %113 = arith.addf %109, %112 : vector<128x1xf32>
    %114 = math.rsqrt %113 : vector<128x1xf32>
    %115 = vector.broadcast %114 : vector<128x1xf32> to vector<128x32xf32>
    %116 = arith.mulf %111, %115 : vector<128x32xf32>
    %117 = vector.broadcast %72 : vector<1x32xf32> to vector<128x32xf32>
    %118 = arith.mulf %116, %117 : vector<128x32xf32>
    %119 = vector.broadcast %73 : vector<1x32xf32> to vector<128x32xf32>
    %120 = arith.addf %118, %119 : vector<128x32xf32>
    %121 = arith.truncf %120 : vector<128x32xf32> to vector<128x32xbf16>
    %cst_50 = arith.constant dense<0.000000e+00> : vector<128x32xf32>
    %122 = tpu.matmul %121, %83, %cst_50 {dimension_numbers = #tpu.dot_dimension_numbers<[1], [0], [0], [1], [0, 0, 1, 1], [], []>} : vector<128x32xbf16>, vector<32x32xbf16>, vector<128x32xf32> -> vector<128x32xf32>
    %123 = vector.broadcast %76 : vector<1x32xf32> to vector<128x32xf32>
    %124 = arith.addf %122, %123 : vector<128x32xf32>
    %cst_51 = arith.constant 5.000000e-01 : f32
    %125 = vector.broadcast %cst_51 : f32 to vector<128x32xf32>
    %126 = arith.mulf %125, %124 : vector<128x32xf32>
    %cst_52 = arith.constant 0.707106769 : f32
    %127 = vector.broadcast %cst_52 : f32 to vector<128x32xf32>
    %128 = arith.mulf %124, %127 : vector<128x32xf32>
    %129 = math.erf %128 : vector<128x32xf32>
    %cst_53 = arith.constant 1.000000e+00 : f32
    %130 = vector.broadcast %cst_53 : f32 to vector<128x32xf32>
    %131 = arith.addf %130, %129 : vector<128x32xf32>
    %132 = arith.mulf %126, %131 : vector<128x32xf32>
    %133 = arith.truncf %132 : vector<128x32xf32> to vector<128x32xbf16>
    %cst_54 = arith.constant dense<0.000000e+00> : vector<128x32xf32>
    %134 = tpu.matmul %133, %85, %cst_54 {dimension_numbers = #tpu.dot_dimension_numbers<[1], [0], [0], [1], [0, 0, 1, 1], [], []>} : vector<128x32xbf16>, vector<32x32xbf16>, vector<128x32xf32> -> vector<128x32xf32>
    %135 = vector.broadcast %77 : vector<1x32xf32> to vector<128x32xf32>
    %136 = arith.addf %134, %135 : vector<128x32xf32>
    %137 = arith.addf %98, %136 : vector<128x32xf32>
    %c0_55 = arith.constant 0 : index
    %c0_56 = arith.constant 0 : index
    %138 = vector.load %arg8[%c0_55, %c0_56] : memref<128x32xf32, #tpu.memory_space<vmem>>, vector<128x32xf32>
    tpu.vector_store %arg8[%c0_55, %c0_56], %137 {strides = array<i32>} : memref<128x32xf32, #tpu.memory_space<vmem>>, vector<128x32xf32>,
    return
  }
  func.func @transform_0(%arg0: i32) -> (i32, i32) {
    %c0_i32 = arith.constant 0 : i32
    %c0_i32_0 = arith.constant 0 : i32
    %c0_i32_1 = arith.constant 0 : i32
    return %c0_i32, %c0_i32_0 : i32, i32
  }
  func.func @transform_1(%arg0: i32) -> (i32, i32) {
    %c0_i32 = arith.constant 0 : i32
    %c0_i32_0 = arith.constant 0 : i32
    %c0_i32_1 = arith.constant 0 : i32
    return %c0_i32, %c0_i32_0 : i32, i32
  }
  func.func @transform_2(%arg0: i32) -> (i32, i32, i32) {
    %c0_i32 = arith.constant 0 : i32
    %c0_i32_0 = arith.constant 0 : i32
    %c0_i32_1 = arith.constant 0 : i32
    %c0_i32_2 = arith.constant 0 : i32
    return %c0_i32, %c0_i32_0, %c0_i32_1 : i32, i32, i32
  }
  func.func @transform_3(%arg0: i32) -> (i32, i32, i32) {
    %c0_i32 = arith.constant 0 : i32
    %c0_i32_0 = arith.constant 0 : i32
    %c0_i32_1 = arith.constant 0 : i32
    %c0_i32_2 = arith.constant 0 : i32
    return %c0_i32, %c0_i32_0, %c0_i32_1 : i32, i32, i32
  }
  func.func @transform_4(%arg0: i32) -> (i32, i32, i32) {
    %c0_i32 = arith.constant 0 : i32
    %c0_i32_0 = arith.constant 0 : i32
    %c0_i32_1 = arith.constant 0 : i32
    %c0_i32_2 = arith.constant 0 : i32
    return %c0_i32, %c0_i32_0, %c0_i32_1 : i32, i32, i32
  }
  func.func @transform_5(%arg0: i32) -> (i32, i32, i32) {
    %c0_i32 = arith.constant 0 : i32
    %c0_i32_0 = arith.constant 0 : i32
    %c0_i32_1 = arith.constant 0 : i32
    %c0_i32_2 = arith.constant 0 : i32
    return %c0_i32, %c0_i32_0, %c0_i32_1 : i32, i32, i32
  }
  func.func @transform_6(%arg0: i32) -> (i32, i32, i32) {
    %c0_i32 = arith.constant 0 : i32
    %c0_i32_0 = arith.constant 0 : i32
    %c0_i32_1 = arith.constant 0 : i32
    %c0_i32_2 = arith.constant 0 : i32
    return %c0_i32, %c0_i32_0, %c0_i32_1 : i32, i32, i32
  }
  func.func @transform_7(%arg0: i32) -> (i32, i32) {
    %c0_i32 = arith.constant 0 : i32
    %c0_i32_0 = arith.constant 0 : i32
    %c0_i32_1 = arith.constant 0 : i32
    return %c0_i32, %c0_i32_0 : i32, i32
  }
}

</mosaic_0001>

<llo_original>
// kernel: tpu_custom_call.1
$region0: #{tpu_custom_call.1}
  #allocation0 [shape = 'u32[]', space=smem, size = 0x4, offset = 0x4, fixed_abs, tag = 'smem constant byte address 0x4 - core index']
  #allocation1 [shape = 'u32[72,128]{1,0:T(1,128)}', space=vmem, size = 0x9000, scoped, tag = 'internal scratch']
  %s0 = inlined_call_operand.vmem [shape: f32[128,32], index: 0, kind: input, shape index: {}]
  %s1 = inlined_call_operand.vmem [shape: f32[2,32], index: 1, kind: input, shape index: {}]
  %s2 = inlined_call_operand.vmem [shape: bf16[2,32,32], index: 2, kind: input, shape index: {}]
  %s3 = inlined_call_operand.vmem [shape: bf16[2,32,32], index: 3, kind: input, shape index: {}]
  %s4 = inlined_call_operand.vmem [shape: bf16[2,32,32], index: 4, kind: input, shape index: {}]
  %s5 = inlined_call_operand.vmem [shape: bf16[2,32,32], index: 5, kind: input, shape index: {}]
  %s6 = inlined_call_operand.vmem [shape: f32[2,8,32], index: 6, kind: input, shape index: {}]
  %s7 = inlined_call_operand.vmem [shape: f32[128,32], index: 7, kind: output, shape index: {}]
  %s8 = sld [smem:[#allocation0]]
  $region38: #{tpu_custom_call.1} parent=0
    _
  %s10 = ssub.s32 1, %s8
  %s11 = scalar_select 0, %s10, %s8
  // Predicated region
  $region2: #{tpu_custom_call.1} parent=0 // pred_check
    _
  $region3: #{tpu_custom_call.1} parent=0 // pred_check_branch
    %13 = sbr.rel (0) target = $region5
  $region4: #{tpu_custom_call.1} parent=0 // pred_region
    _
  $region5: #{tpu_custom_call.1} parent=0 // pred_fallthru
    _
  // Predicated region
  $region6: #{tpu_custom_call.1} parent=0 // pred_check
    _
  $region7: #{tpu_custom_call.1} parent=0 // pred_check_branch
    %15 = sbr.rel (0) target = $region9
  $region8: #{tpu_custom_call.1} parent=0 // pred_region
    _
  $region9: #{tpu_custom_call.1} parent=0 // pred_fallthru
    _
  // Predicated region
  $region10: #{tpu_custom_call.1} parent=0 // pred_check
    _
  $region11: #{tpu_custom_call.1} parent=0 // pred_check_branch
    %17 = sbr.rel (0) target = $region13
  $region12: #{tpu_custom_call.1} parent=0 // pred_region
    _
  $region13: #{tpu_custom_call.1} parent=0 // pred_fallthru
    _
  // Predicated region
  $region14: #{tpu_custom_call.1} parent=0 // pred_check
    _
  $region15: #{tpu_custom_call.1} parent=0 // pred_check_branch
    %19 = sbr.rel (0) target = $region17
  $region16: #{tpu_custom_call.1} parent=0 // pred_region
    _
  $region17: #{tpu_custom_call.1} parent=0 // pred_fallthru
    _
  // Predicated region
  $region18: #{tpu_custom_call.1} parent=0 // pred_check
    _
  $region19: #{tpu_custom_call.1} parent=0 // pred_check_branch
    %21 = sbr.rel (0) target = $region21
  $region20: #{tpu_custom_call.1} parent=0 // pred_region
    _
  $region21: #{tpu_custom_call.1} parent=0 // pred_fallthru
    _
  // Predicated region
  $region22: #{tpu_custom_call.1} parent=0 // pred_check
    _
  $region23: #{tpu_custom_call.1} parent=0 // pred_check_branch
    %23 = sbr.rel (0) target = $region25
  $region24: #{tpu_custom_call.1} parent=0 // pred_region
    _
  $region25: #{tpu_custom_call.1} parent=0 // pred_fallthru
    _
  // Predicated region
  $region26: #{tpu_custom_call.1} parent=0 // pred_check
    _
  $region27: #{tpu_custom_call.1} parent=0 // pred_check_branch
    %25 = sbr.rel (0) target = $region29
  $region28: #{tpu_custom_call.1} parent=0 // pred_region
    _
  $region29: #{tpu_custom_call.1} parent=0 // pred_fallthru
    _
  %v27 = vld [vmem:[%s0] sm:$0xff]
  %v28 = vld [vmem:[%s0 + $0x8] sm:$0xff]
  %v29 = vld [vmem:[%s0 + $0x10] sm:$0xff]
  %v30 = vld [vmem:[%s0 + $0x18] sm:$0xff]
  %v31 = vld [vmem:[%s0 + $0x20] sm:$0xff]
  %v32 = vld [vmem:[%s0 + $0x28] sm:$0xff]
  %v33 = vld [vmem:[%s0 + $0x30] sm:$0xff]
  %v34 = vld [vmem:[%s0 + $0x38] sm:$0xff]
  %v35 = vld [vmem:[%s0 + $0x40] sm:$0xff]
  %v36 = vld [vmem:[%s0 + $0x48] sm:$0xff]
  %v37 = vld [vmem:[%s0 + $0x50] sm:$0xff]
  %v38 = vld [vmem:[%s0 + $0x58] sm:$0xff]
  %v39 = vld [vmem:[%s0 + $0x60] sm:$0xff]
  %v40 = vld [vmem:[%s0 + $0x68] sm:$0xff]
  %v41 = vld [vmem:[%s0 + $0x70] sm:$0xff]
  %v42 = vld [vmem:[%s0 + $0x78] sm:$0xff]
  %v43 = vld [vmem:[%s1] sm:$0x3]
  %v44 = vld [vmem:[%s6] sm:$0xff]
  %v45 = vld [vmem:[%s2] sm:$0xf]
  %v46 = vld [vmem:[%s2 + $0x4] sm:$0xf]
  %v47 = vld [vmem:[%s2 + $0x8] sm:$0xf]
  %v48 = vld [vmem:[%s2 + $0xc] sm:$0xf]
  %v49 = vld [vmem:[%s3] sm:$0xf]
  %v50 = vld [vmem:[%s3 + $0x4] sm:$0xf]
  %v51 = vld [vmem:[%s3 + $0x8] sm:$0xf]
  %v52 = vld [vmem:[%s3 + $0xc] sm:$0xf]
  %v53 = vld [vmem:[%s4] sm:$0xf]
  %v54 = vld [vmem:[%s4 + $0x4] sm:$0xf]
  %v55 = vld [vmem:[%s4 + $0x8] sm:$0xf]
  %v56 = vld [vmem:[%s4 + $0xc] sm:$0xf]
  %v57 = vld [vmem:[%s5] sm:$0xf]
  %v58 = vld [vmem:[%s5 + $0x4] sm:$0xf]
  %v59 = vld [vmem:[%s5 + $0x8] sm:$0xf]
  %v60 = vld [vmem:[%s5 + $0xc] sm:$0xf]
  %v61 = vpack.c.bf16 %v43, %v43
  %v62 = vperm.slane %v44, 2
  %v67 = vunpack.c.l.b16 %v45
  %v68 = vunpack.c.l.b16 %v46
  %v69 = vunpack.c.l.b16 %v47
  %v70 = vunpack.c.l.b16 %v48
  %v71 = vpack.c.b16 %v68, %v67
  %v72 = vpack.c.b16 %v70, %v69
  %vm75 = vcmask 261120
  %v77 = vsel %vm75, %v61, 0
  %79 = vmatpush.bf16.msra.mxu0 0
  %80 = vmatpush.bf16.msra.mxu0 0
  %81 = vmatpush.bf16.msra.mxu0 0
  %82 = vmatpush.bf16.msra.mxu0 0
  %83 = vmatpush.bf16.msra.mxu0 0
  %84 = vmatpush.bf16.msra.mxu0 0
  %85 = vmatpush.bf16.msra.mxu0 %v72
  %86 = vmatpush.bf16.msra.mxu0 %v71
  %87 = vmatmul.bf16.gmra.mxu0 %v77
  %v88 = vpop.f32.mrf.mxu0
  %v89 = vadd.f32 %v62, %v88
  %v90 = vpop.f32.mrf.mxu0
  %91 = vdwg.mxu0
  %v92 = vpack.c.bf16 %v89, %v89
  %v93 = vperm.slane %v44, 3
  %v98 = vunpack.c.l.b16 %v49
  %v99 = vunpack.c.l.b16 %v50
  %v100 = vunpack.c.l.b16 %v51
  %v101 = vunpack.c.l.b16 %v52
  %v102 = vpack.c.b16 %v99, %v98
  %v103 = vpack.c.b16 %v101, %v100
  %v107 = vsel %vm75, %v92, 0
  %109 = vmatpush.bf16.msra.mxu0 0
  %110 = vmatpush.bf16.msra.mxu0 0
  %111 = vmatpush.bf16.msra.mxu0 0
  %112 = vmatpush.bf16.msra.mxu0 0
  %113 = vmatpush.bf16.msra.mxu0 0
  %114 = vmatpush.bf16.msra.mxu0 0
  %115 = vmatpush.bf16.msra.mxu0 %v103
  %116 = vmatpush.bf16.msra.mxu0 %v102
  %117 = vmatmul.bf16.gmra.mxu0 %v107
  %v118 = vpop.f32.mrf.mxu0
  %v119 = vadd.f32 %v93, %v118
  %v120 = vpop.f32.mrf.mxu0
  %121 = vdwg.mxu0
  %v123 = vrot.slane %v119, 1
  %v124 = vperm.slane %v119, 0
  %v125 = vperm.slane %v123, 0
  %v128 = vadd.f32 %v27, %v124
  %v129 = vadd.f32 %v28, %v124
  %v130 = vadd.f32 %v29, %v124
  %v131 = vadd.f32 %v30, %v124
  %v132 = vadd.f32 %v31, %v124
  %v133 = vadd.f32 %v32, %v124
  %v134 = vadd.f32 %v33, %v124
  %v135 = vadd.f32 %v34, %v124
  %v136 = vadd.f32 %v35, %v125
  %v137 = vadd.f32 %v36, %v125
  %v138 = vadd.f32 %v37, %v125
  %v139 = vadd.f32 %v38, %v125
  %v140 = vadd.f32 %v39, %v125
  %v141 = vadd.f32 %v40, %v125
  %v142 = vadd.f32 %v41, %v125
  %v143 = vadd.f32 %v42, %v125
  %v144 = vsel %vm75, %v128, 0.0
  %145 = vadd.xlane.f32.xlu0 %v144
  %v146 = vpop.xlane.xlu0 %145
  %v147 = vsel %vm75, %v129, 0.0
  %148 = vadd.xlane.f32.xlu0 %v147
  %v149 = vpop.xlane.xlu0 %148
  %v150 = vsel %vm75, %v130, 0.0
  %151 = vadd.xlane.f32.xlu0 %v150
  %v152 = vpop.xlane.xlu0 %151
  %v153 = vsel %vm75, %v131, 0.0
  %154 = vadd.xlane.f32.xlu0 %v153
  %v155 = vpop.xlane.xlu0 %154
  %v156 = vsel %vm75, %v132, 0.0
  %157 = vadd.xlane.f32.xlu0 %v156
  %v158 = vpop.xlane.xlu0 %157
  %v159 = vsel %vm75, %v133, 0.0
  %160 = vadd.xlane.f32.xlu0 %v159
  %v161 = vpop.xlane.xlu0 %160
  %v162 = vsel %vm75, %v134, 0.0
  %163 = vadd.xlane.f32.xlu0 %v162
  %v164 = vpop.xlane.xlu0 %163
  %v165 = vsel %vm75, %v135, 0.0
  %166 = vadd.xlane.f32.xlu0 %v165
  %v167 = vpop.xlane.xlu0 %166
  %v168 = vsel %vm75, %v136, 0.0
  %169 = vadd.xlane.f32.xlu0 %v168
  %v170 = vpop.xlane.xlu0 %169
  %v171 = vsel %vm75, %v137, 0.0
  %172 = vadd.xlane.f32.xlu0 %v171
  %v173 = vpop.xlane.xlu0 %172
  %v174 = vsel %vm75, %v138, 0.0
  %175 = vadd.xlane.f32.xlu0 %v174
  %v176 = vpop.xlane.xlu0 %175
  %v177 = vsel %vm75, %v139, 0.0
  %178 = vadd.xlane.f32.xlu0 %v177
  %v179 = vpop.xlane.xlu0 %178
  %v180 = vsel %vm75, %v140, 0.0
  %181 = vadd.xlane.f32.xlu0 %v180
  %v182 = vpop.xlane.xlu0 %181
  %v183 = vsel %vm75, %v141, 0.0
  %184 = vadd.xlane.f32.xlu0 %v183
  %v185 = vpop.xlane.xlu0 %184
  %v186 = vsel %vm75, %v142, 0.0
  %187 = vadd.xlane.f32.xlu0 %v186
  %v188 = vpop.xlane.xlu0 %187
  %v189 = vsel %vm75, %v143, 0.0
  %190 = vadd.xlane.f32.xlu0 %v189
  %v191 = vpop.xlane.xlu0 %190
  %v192 = vrcp.pop 32.0
  %v193 = vmul.f32 32.0, %v192
  %v194 = vsub.f32 1.0, %v193
  %v195 = vmul.f32 %v192, %v194
  %v196 = vadd.f32 %v192, %v195
  %vm197 = vweird.f32 %v192
  %v198 = vsel %vm197, %v192, %v196
  %v199 = vmul.f32 %v146, %v198
  %v200 = vmul.f32 %v149, %v198
  %v201 = vmul.f32 %v152, %v198
  %v202 = vmul.f32 %v155, %v198
  %v203 = vmul.f32 %v158, %v198
  %v204 = vmul.f32 %v161, %v198
  %v205 = vmul.f32 %v164, %v198
  %v206 = vmul.f32 %v167, %v198
  %v207 = vmul.f32 %v170, %v198
  %v208 = vmul.f32 %v173, %v198
  %v209 = vmul.f32 %v176, %v198
  %v210 = vmul.f32 %v179, %v198
  %v211 = vmul.f32 %v182, %v198
  %v212 = vmul.f32 %v185, %v198
  %v213 = vmul.f32 %v188, %v198
  %v214 = vmul.f32 %v191, %v198
  %v215 = vsub.f32 %v128, %v199
  %v216 = vsub.f32 %v129, %v200
  %v217 = vsub.f32 %v130, %v201
  %v218 = vsub.f32 %v131, %v202
  %v219 = vsub.f32 %v132, %v203
  %v220 = vsub.f32 %v133, %v204
  %v221 = vsub.f32 %v134, %v205
  %v222 = vsub.f32 %v135, %v206
  %v223 = vsub.f32 %v136, %v207
  %v224 = vsub.f32 %v137, %v208
  %v225 = vsub.f32 %v138, %v209
  %v226 = vsub.f32 %v139, %v210
  %v227 = vsub.f32 %v140, %v211
  %v228 = vsub.f32 %v141, %v212
  %v229 = vsub.f32 %v142, %v213
  %v230 = vsub.f32 %v143, %v214
  %v231 = vmul.f32 %v215, %v215
  %v232 = vmul.f32 %v216, %v216
  %v233 = vmul.f32 %v217, %v217
  %v234 = vmul.f32 %v218, %v218
  %v235 = vmul.f32 %v219, %v219
  %v236 = vmul.f32 %v220, %v220
  %v237 = vmul.f32 %v221, %v221
  %v238 = vmul.f32 %v222, %v222
  %v239 = vmul.f32 %v223, %v223
  %v240 = vmul.f32 %v224, %v224
  %v241 = vmul.f32 %v225, %v225
  %v242 = vmul.f32 %v226, %v226
  %v243 = vmul.f32 %v227, %v227
  %v244 = vmul.f32 %v228, %v228
  %v245 = vmul.f32 %v229, %v229
  %v246 = vmul.f32 %v230, %v230
  %v247 = vsel %vm75, %v231, 0.0
  %248 = vadd.xlane.f32.xlu0 %v247
  %v249 = vpop.xlane.xlu0 %248
  %v250 = vsel %vm75, %v232, 0.0
  %251 = vadd.xlane.f32.xlu0 %v250
  %v252 = vpop.xlane.xlu0 %251
  %v253 = vsel %vm75, %v233, 0.0
  %254 = vadd.xlane.f32.xlu0 %v253
  %v255 = vpop.xlane.xlu0 %254
  %v256 = vsel %vm75, %v234, 0.0
  %257 = vadd.xlane.f32.xlu0 %v256
  %v258 = vpop.xlane.xlu0 %257
  %v259 = vsel %vm75, %v235, 0.0
  %260 = vadd.xlane.f32.xlu0 %v259
  %v261 = vpop.xlane.xlu0 %260
  %v262 = vsel %vm75, %v236, 0.0
  %263 = vadd.xlane.f32.xlu0 %v262
  %v264 = vpop.xlane.xlu0 %263
  %v265 = vsel %vm75, %v237, 0.0
  %266 = vadd.xlane.f32.xlu0 %v265
  %v267 = vpop.xlane.xlu0 %266
  %v268 = vsel %vm75, %v238, 0.0
  %269 = vadd.xlane.f32.xlu0 %v268
  %v270 = vpop.xlane.xlu0 %269
  %v271 = vsel %vm75, %v239, 0.0
  %272 = vadd.xlane.f32.xlu0 %v271
  %v273 = vpop.xlane.xlu0 %272
  %v274 = vsel %vm75, %v240, 0.0
  %275 = vadd.xlane.f32.xlu0 %v274
  %v276 = vpop.xlane.xlu0 %275
  %v277 = vsel %vm75, %v241, 0.0
  %278 = vadd.xlane.f32.xlu0 %v277
  %v279 = vpop.xlane.xlu0 %278
  %v280 = vsel %vm75, %v242, 0.0
  %281 = vadd.xlane.f32.xlu0 %v280
  %v282 = vpop.xlane.xlu0 %281
  %v283 = vsel %vm75, %v243, 0.0
  %284 = vadd.xlane.f32.xlu0 %v283
  %v285 = vpop.xlane.xlu0 %284
  %v286 = vsel %vm75, %v244, 0.0
  %287 = vadd.xlane.f32.xlu0 %v286
  %v288 = vpop.xlane.xlu0 %287
  %v289 = vsel %vm75, %v245, 0.0
  %290 = vadd.xlane.f32.xlu0 %v289
  %v291 = vpop.xlane.xlu0 %290
  %v292 = vsel %vm75, %v246, 0.0
  %293 = vadd.xlane.f32.xlu0 %v292
  %v294 = vpop.xlane.xlu0 %293
  %v295 = vmul.f32 %v249, %v198
  %v296 = vmul.f32 %v252, %v198
  %v297 = vmul.f32 %v255, %v198
  %v298 = vmul.f32 %v258, %v198
  %v299 = vmul.f32 %v261, %v198
  %v300 = vmul.f32 %v264, %v198
  %v301 = vmul.f32 %v267, %v198
  %v302 = vmul.f32 %v270, %v198
  %v303 = vmul.f32 %v273, %v198
  %v304 = vmul.f32 %v276, %v198
  %v305 = vmul.f32 %v279, %v198
  %v306 = vmul.f32 %v282, %v198
  %v307 = vmul.f32 %v285, %v198
  %v308 = vmul.f32 %v288, %v198
  %v309 = vmul.f32 %v291, %v198
  %v310 = vmul.f32 %v294, %v198
  %v311 = vadd.f32 %v295, 1e-05
  %v312 = vadd.f32 %v296, 1e-05
  %v313 = vadd.f32 %v297, 1e-05
  %v314 = vadd.f32 %v298, 1e-05
  %v315 = vadd.f32 %v299, 1e-05
  %v316 = vadd.f32 %v300, 1e-05
  %v317 = vadd.f32 %v301, 1e-05
  %v318 = vadd.f32 %v302, 1e-05
  %v319 = vadd.f32 %v303, 1e-05
  %v320 = vadd.f32 %v304, 1e-05
  %v321 = vadd.f32 %v305, 1e-05
  %v322 = vadd.f32 %v306, 1e-05
  %v323 = vadd.f32 %v307, 1e-05
  %v324 = vadd.f32 %v308, 1e-05
  %v325 = vadd.f32 %v309, 1e-05
  %v326 = vadd.f32 %v310, 1e-05
  %v327 = vrsqrt.pop %v311
  %v328 = vmul.f32 %v327, %v311
  %v329 = vmul.f32 %v328, %v327
  %v330 = vmul.f32 0.5, %v329
  %v331 = vsub.f32 1.5, %v330
  %v332 = vmul.f32 %v327, %v331
  %vm333 = vweird.f32 %v311
  %vm334 = vweird.f32 %v327
  %vm335 = vmor %vm333, %vm334
  %v336 = vsel %vm335, %v327, %v332
  %v337 = vrsqrt.pop %v312
  %v338 = vmul.f32 %v337, %v312
  %v339 = vmul.f32 %v338, %v337
  %v340 = vmul.f32 0.5, %v339
  %v341 = vsub.f32 1.5, %v340
  %v342 = vmul.f32 %v337, %v341
  %vm343 = vweird.f32 %v312
  %vm344 = vweird.f32 %v337
  %vm345 = vmor %vm343, %vm344
  %v346 = vsel %vm345, %v337, %v342
  %v347 = vrsqrt.pop %v313
  %v348 = vmul.f32 %v347, %v313
  %v349 = vmul.f32 %v348, %v347
  %v350 = vmul.f32 0.5, %v349
  %v351 = vsub.f32 1.5, %v350
  %v352 = vmul.f32 %v347, %v351
  %vm353 = vweird.f32 %v313
  %vm354 = vweird.f32 %v347
  %vm355 = vmor %vm353, %vm354
  %v356 = vsel %vm355, %v347, %v352
  %v357 = vrsqrt.pop %v314
  %v358 = vmul.f32 %v357, %v314
  %v359 = vmul.f32 %v358, %v357
  %v360 = vmul.f32 0.5, %v359
  %v361 = vsub.f32 1.5, %v360
  %v362 = vmul.f32 %v357, %v361
  %vm363 = vweird.f32 %v314
  %vm364 = vweird.f32 %v357
  %vm365 = vmor %vm363, %vm364
  %v366 = vsel %vm365, %v357, %v362
  %v367 = vrsqrt.pop %v315
  %v368 = vmul.f32 %v367, %v315
  %v369 = vmul.f32 %v368, %v367
  %v370 = vmul.f32 0.5, %v369
  %v371 = vsub.f32 1.5, %v370
  %v372 = vmul.f32 %v367, %v371
  %vm373 = vweird.f32 %v315
  %vm374 = vweird.f32 %v367
  %vm375 = vmor %vm373, %vm374
  %v376 = vsel %vm375, %v367, %v372
  %v377 = vrsqrt.pop %v316
  %v378 = vmul.f32 %v377, %v316
  %v379 = vmul.f32 %v378, %v377
  %v380 = vmul.f32 0.5, %v379
  %v381 = vsub.f32 1.5, %v380
  %v382 = vmul.f32 %v377, %v381
  %vm383 = vweird.f32 %v316
  %vm384 = vweird.f32 %v377
  %vm385 = vmor %vm383, %vm384
  %v386 = vsel %vm385, %v377, %v382
  %v387 = vrsqrt.pop %v317
  %v388 = vmul.f32 %v387, %v317
  %v389 = vmul.f32 %v388, %v387
  %v390 = vmul.f32 0.5, %v389
  %v391 = vsub.f32 1.5, %v390
  %v392 = vmul.f32 %v387, %v391
  %vm393 = vweird.f32 %v317
  %vm394 = vweird.f32 %v387
  %vm395 = vmor %vm393, %vm394
  %v396 = vsel %vm395, %v387, %v392
  %v397 = vrsqrt.pop %v318
  %v398 = vmul.f32 %v397, %v318
  %v399 = vmul.f32 %v398, %v397
  %v400 = vmul.f32 0.5, %v399
  %v401 = vsub.f32 1.5, %v400
  %v402 = vmul.f32 %v397, %v401
  %vm403 = vweird.f32 %v318
  %vm404 = vweird.f32 %v397
  %vm405 = vmor %vm403, %vm404
  %v406 = vsel %vm405, %v397, %v402
  %v407 = vrsqrt.pop %v319
  %v408 = vmul.f32 %v407, %v319
  %v409 = vmul.f32 %v408, %v407
  %v410 = vmul.f32 0.5, %v409
  %v411 = vsub.f32 1.5, %v410
  %v412 = vmul.f32 %v407, %v411
  %vm413 = vweird.f32 %v319
  %vm414 = vweird.f32 %v407
  %vm415 = vmor %vm413, %vm414
  %v416 = vsel %vm415, %v407, %v412
  %v417 = vrsqrt.pop %v320
  %v418 = vmul.f32 %v417, %v320
  %v419 = vmul.f32 %v418, %v417
  %v420 = vmul.f32 0.5, %v419
  %v421 = vsub.f32 1.5, %v420
  %v422 = vmul.f32 %v417, %v421
  %vm423 = vweird.f32 %v320
  %vm424 = vweird.f32 %v417
  %vm425 = vmor %vm423, %vm424
  %v426 = vsel %vm425, %v417, %v422
  %v427 = vrsqrt.pop %v321
  %v428 = vmul.f32 %v427, %v321
  %v429 = vmul.f32 %v428, %v427
  %v430 = vmul.f32 0.5, %v429
  %v431 = vsub.f32 1.5, %v430
  %v432 = vmul.f32 %v427, %v431
  %vm433 = vweird.f32 %v321
  %vm434 = vweird.f32 %v427
  %vm435 = vmor %vm433, %vm434
  %v436 = vsel %vm435, %v427, %v432
  %v437 = vrsqrt.pop %v322
  %v438 = vmul.f32 %v437, %v322
  %v439 = vmul.f32 %v438, %v437
  %v440 = vmul.f32 0.5, %v439
  %v441 = vsub.f32 1.5, %v440
  %v442 = vmul.f32 %v437, %v441
  %vm443 = vweird.f32 %v322
  %vm444 = vweird.f32 %v437
  %vm445 = vmor %vm443, %vm444
  %v446 = vsel %vm445, %v437, %v442
  %v447 = vrsqrt.pop %v323
  %v448 = vmul.f32 %v447, %v323
  %v449 = vmul.f32 %v448, %v447
  %v450 = vmul.f32 0.5, %v449
  %v451 = vsub.f32 1.5, %v450
  %v452 = vmul.f32 %v447, %v451
  %vm453 = vweird.f32 %v323
  %vm454 = vweird.f32 %v447
  %vm455 = vmor %vm453, %vm454
  %v456 = vsel %vm455, %v447, %v452
  %v457 = vrsqrt.pop %v324
  %v458 = vmul.f32 %v457, %v324
  %v459 = vmul.f32 %v458, %v457
  %v460 = vmul.f32 0.5, %v459
  %v461 = vsub.f32 1.5, %v460
  %v462 = vmul.f32 %v457, %v461
  %vm463 = vweird.f32 %v324
  %vm464 = vweird.f32 %v457
  %vm465 = vmor %vm463, %vm464
  %v466 = vsel %vm465, %v457, %v462
  %v467 = vrsqrt.pop %v325
  %v468 = vmul.f32 %v467, %v325
  %v469 = vmul.f32 %v468, %v467
  %v470 = vmul.f32 0.5, %v469
  %v471 = vsub.f32 1.5, %v470
  %v472 = vmul.f32 %v467, %v471
  %vm473 = vweird.f32 %v325
  %vm474 = vweird.f32 %v467
  %vm475 = vmor %vm473, %vm474
  %v476 = vsel %vm475, %v467, %v472
  %v477 = vrsqrt.pop %v326
  %v478 = vmul.f32 %v477, %v326
  %v479 = vmul.f32 %v478, %v477
  %v480 = vmul.f32 0.5, %v479
  %v481 = vsub.f32 1.5, %v480
  %v482 = vmul.f32 %v477, %v481
  %vm483 = vweird.f32 %v326
  %vm484 = vweird.f32 %v477
  %vm485 = vmor %vm483, %vm484
  %v486 = vsel %vm485, %v477, %v482
  %v487 = vmul.f32 %v215, %v336
  %v488 = vmul.f32 %v216, %v346
  %v489 = vmul.f32 %v217, %v356
  %v490 = vmul.f32 %v218, %v366
  %v491 = vmul.f32 %v219, %v376
  %v492 = vmul.f32 %v220, %v386
  %v493 = vmul.f32 %v221, %v396
  %v494 = vmul.f32 %v222, %v406
  %v495 = vmul.f32 %v223, %v416
  %v496 = vmul.f32 %v224, %v426
  %v497 = vmul.f32 %v225, %v436
  %v498 = vmul.f32 %v226, %v446
  %v499 = vmul.f32 %v227, %v456
  %v500 = vmul.f32 %v228, %v466
  %v501 = vmul.f32 %v229, %v476
  %v502 = vmul.f32 %v230, %v486
  %v503 = vperm.slane %v44, 0
  %v504 = vmul.f32 %v487, %v503
  %v505 = vmul.f32 %v488, %v503
  %v506 = vmul.f32 %v489, %v503
  %v507 = vmul.f32 %v490, %v503
  %v508 = vmul.f32 %v491, %v503
  %v509 = vmul.f32 %v492, %v503
  %v510 = vmul.f32 %v493, %v503
  %v511 = vmul.f32 %v494, %v503
  %v512 = vmul.f32 %v495, %v503
  %v513 = vmul.f32 %v496, %v503
  %v514 = vmul.f32 %v497, %v503
  %v515 = vmul.f32 %v498, %v503
  %v516 = vmul.f32 %v499, %v503
  %v517 = vmul.f32 %v500, %v503
  %v518 = vmul.f32 %v501, %v503
  %v519 = vmul.f32 %v502, %v503
  %v520 = vperm.slane %v44, 1
  %v521 = vadd.f32 %v504, %v520
  %v522 = vadd.f32 %v505, %v520
  %v523 = vadd.f32 %v506, %v520
  %v524 = vadd.f32 %v507, %v520
  %v525 = vadd.f32 %v508, %v520
  %v526 = vadd.f32 %v509, %v520
  %v527 = vadd.f32 %v510, %v520
  %v528 = vadd.f32 %v511, %v520
  %v529 = vadd.f32 %v512, %v520
  %v530 = vadd.f32 %v513, %v520
  %v531 = vadd.f32 %v514, %v520
  %v532 = vadd.f32 %v515, %v520
  %v533 = vadd.f32 %v516, %v520
  %v534 = vadd.f32 %v517, %v520
  %v535 = vadd.f32 %v518, %v520
  %v536 = vadd.f32 %v519, %v520
  %v537 = vpack.c.bf16 %v522, %v521
  %v538 = vpack.c.bf16 %v524, %v523
  %v539 = vpack.c.bf16 %v526, %v525
  %v540 = vpack.c.bf16 %v528, %v527
  %v541 = vpack.c.bf16 %v530, %v529
  %v542 = vpack.c.bf16 %v532, %v531
  %v543 = vpack.c.bf16 %v534, %v533
  %v544 = vpack.c.bf16 %v536, %v535
  %v545 = vperm.slane %v44, 4
  %v550 = vunpack.c.l.b16 %v53
  %v551 = vunpack.c.l.b16 %v54
  %v552 = vunpack.c.l.b16 %v55
  %v553 = vunpack.c.l.b16 %v56
  %v554 = vpack.c.b16 %v551, %v550
  %v555 = vpack.c.b16 %v553, %v552
  %v559 = vsel %vm75, %v537, 0
  %v562 = vsel %vm75, %v538, 0
  %v565 = vsel %vm75, %v539, 0
  %v568 = vsel %vm75, %v540, 0
  %v571 = vsel %vm75, %v541, 0
  %v574 = vsel %vm75, %v542, 0
  %v577 = vsel %vm75, %v543, 0
  %v580 = vsel %vm75, %v544, 0
  %582 = vmatpush.bf16.msra.mxu0 0
  %583 = vmatpush.bf16.msra.mxu0 0
  %584 = vmatpush.bf16.msra.mxu0 0
  %585 = vmatpush.bf16.msra.mxu0 0
  %586 = vmatpush.bf16.msra.mxu0 0
  %587 = vmatpush.bf16.msra.mxu0 0
  %588 = vmatpush.bf16.msra.mxu0 %v555
  %589 = vmatpush.bf16.msra.mxu0 %v554
  %590 = vmatmul.bf16.gmra.mxu0 %v559
  %v591 = vpop.f32.mrf.mxu0
  %v592 = vadd.f32 %v545, %v591
  %v593 = vpop.f32.mrf.mxu0
  %v594 = vadd.f32 %v545, %v593
  %595 = vmatmul.bf16.gmra.mxu0 %v562
  %v596 = vpop.f32.mrf.mxu0
  %v597 = vadd.f32 %v545, %v596
  %v598 = vpop.f32.mrf.mxu0
  %v599 = vadd.f32 %v545, %v598
  %600 = vmatmul.bf16.gmra.mxu0 %v565
  %v601 = vpop.f32.mrf.mxu0
  %v602 = vadd.f32 %v545, %v601
  %v603 = vpop.f32.mrf.mxu0
  %v604 = vadd.f32 %v545, %v603
  %605 = vmatmul.bf16.gmra.mxu0 %v568
  %v606 = vpop.f32.mrf.mxu0
  %v607 = vadd.f32 %v545, %v606
  %v608 = vpop.f32.mrf.mxu0
  %v609 = vadd.f32 %v545, %v608
  %610 = vmatmul.bf16.gmra.mxu0 %v571
  %v611 = vpop.f32.mrf.mxu0
  %v612 = vadd.f32 %v545, %v611
  %v613 = vpop.f32.mrf.mxu0
  %v614 = vadd.f32 %v545, %v613
  %615 = vmatmul.bf16.gmra.mxu0 %v574
  %v616 = vpop.f32.mrf.mxu0
  %v617 = vadd.f32 %v545, %v616
  %v618 = vpop.f32.mrf.mxu0
  %v619 = vadd.f32 %v545, %v618
  %620 = vmatmul.bf16.gmra.mxu0 %v577
  %v621 = vpop.f32.mrf.mxu0
  %v622 = vadd.f32 %v545, %v621
  %v623 = vpop.f32.mrf.mxu0
  %v624 = vadd.f32 %v545, %v623
  %625 = vmatmul.bf16.gmra.mxu0 %v580
  %v626 = vpop.f32.mrf.mxu0
  %v627 = vadd.f32 %v545, %v626
  %v628 = vpop.f32.mrf.mxu0
  %v629 = vadd.f32 %v545, %v628
  %630 = vdwg.mxu0
  %v631 = vmul.f32 %v592, 0.5
  %v632 = vmul.f32 %v594, 0.5
  %v633 = vmul.f32 %v597, 0.5
  %v634 = vmul.f32 %v599, 0.5
  %v635 = vmul.f32 %v602, 0.5
  %v636 = vmul.f32 %v604, 0.5
  %v637 = vmul.f32 %v607, 0.5
  %v638 = vmul.f32 %v609, 0.5
  %v639 = vmul.f32 %v612, 0.5
  %v640 = vmul.f32 %v614, 0.5
  %v641 = vmul.f32 %v617, 0.5
  %v642 = vmul.f32 %v619, 0.5
  %v643 = vmul.f32 %v622, 0.5
  %v644 = vmul.f32 %v624, 0.5
  %v645 = vmul.f32 %v627, 0.5
  %v646 = vmul.f32 %v629, 0.5
  %v647 = vmul.f32 %v592, 0.70710677
  %v648 = vmul.f32 %v594, 0.70710677
  %v649 = vmul.f32 %v597, 0.70710677
  %v650 = vmul.f32 %v599, 0.70710677
  %v651 = vmul.f32 %v602, 0.70710677
  %v652 = vmul.f32 %v604, 0.70710677
  %v653 = vmul.f32 %v607, 0.70710677
  %v654 = vmul.f32 %v609, 0.70710677
  %v655 = vmul.f32 %v612, 0.70710677
  %v656 = vmul.f32 %v614, 0.70710677
  %v657 = vmul.f32 %v617, 0.70710677
  %v658 = vmul.f32 %v619, 0.70710677
  %v659 = vmul.f32 %v622, 0.70710677
  %v660 = vmul.f32 %v624, 0.70710677
  %v661 = vmul.f32 %v627, 0.70710677
  %v662 = vmul.f32 %v629, 0.70710677
  %v663 = vmul.f32 %v647, %v647
  %v664 = vmin.f32 16.0, %v663
  %v665 = vmul.f32 %v664, 2.1237322e-06
  %v666 = vadd.f32 %v665, 0.00028619796
  %v667 = vmul.f32 %v664, %v666
  %v668 = vadd.f32 %v667, 0.0036580483
  %v669 = vmul.f32 %v664, %v668
  %v670 = vadd.f32 %v669, 0.05243302
  %v671 = vmul.f32 %v664, %v670
  %v672 = vadd.f32 %v671, 0.18741608
  %v673 = vmul.f32 %v664, %v672
  %v674 = vadd.f32 %v673, 1.1283791
  %v675 = vmul.f32 %v647, %v674
  %v676 = vmul.f32 %v664, 3.8918573e-05
  %v677 = vadd.f32 %v676, 0.001143296
  %v678 = vmul.f32 %v664, %v677
  %v679 = vadd.f32 %v678, 0.014752088
  %v680 = vmul.f32 %v664, %v679
  %v681 = vadd.f32 %v680, 0.112945676
  %v682 = vmul.f32 %v664, %v681
  %v683 = vadd.f32 %v682, 0.4994258
  %v684 = vmul.f32 %v664, %v683
  %v685 = vadd.f32 %v684, 1.0
  %v686 = vrcp.pop %v685
  %v687 = vmul.f32 %v685, %v686
  %v688 = vsub.f32 1.0, %v687
  %v689 = vmul.f32 %v686, %v688
  %v690 = vadd.f32 %v686, %v689
  %vm691 = vweird.f32 %v685
  %vm692 = vweird.f32 %v686
  %vm693 = vmor %vm691, %vm692
  %v694 = vsel %vm693, %v686, %v690
  %v695 = vand.u32 2147483647, %v685
  %vm696 = vcmp.eq.f32.partialorder %v695, 8.507059e+37
  %v697 = vand.u32 %v685, 2147483648
  %v698 = vor.u32 1.1754944e-38, %v697
  %v699 = vsel %vm696, %v698, %v694
  %v700 = vmul.f32 %v675, %v699
  %v701 = vmin.f32 %v700, 1.0
  %v702 = vmax.f32 %v701, -1.0
  %v703 = vmul.f32 %v648, %v648
  %v704 = vmin.f32 16.0, %v703
  %v705 = vmul.f32 %v704, 2.1237322e-06
  %v706 = vadd.f32 %v705, 0.00028619796
  %v707 = vmul.f32 %v704, %v706
  %v708 = vadd.f32 %v707, 0.0036580483
  %v709 = vmul.f32 %v704, %v708
  %v710 = vadd.f32 %v709, 0.05243302
  %v711 = vmul.f32 %v704, %v710
  %v712 = vadd.f32 %v711, 0.18741608
  %v713 = vmul.f32 %v704, %v712
  %v714 = vadd.f32 %v713, 1.1283791
  %v715 = vmul.f32 %v648, %v714
  %v716 = vmul.f32 %v704, 3.8918573e-05
  %v717 = vadd.f32 %v716, 0.001143296
  %v718 = vmul.f32 %v704, %v717
  %v719 = vadd.f32 %v718, 0.014752088
  %v720 = vmul.f32 %v704, %v719
  %v721 = vadd.f32 %v720, 0.112945676
  %v722 = vmul.f32 %v704, %v721
  %v723 = vadd.f32 %v722, 0.4994258
  %v724 = vmul.f32 %v704, %v723
  %v725 = vadd.f32 %v724, 1.0
  %v726 = vrcp.pop %v725
  %v727 = vmul.f32 %v725, %v726
  %v728 = vsub.f32 1.0, %v727
  %v729 = vmul.f32 %v726, %v728
  %v730 = vadd.f32 %v726, %v729
  %vm731 = vweird.f32 %v725
  %vm732 = vweird.f32 %v726
  %vm733 = vmor %vm731, %vm732
  %v734 = vsel %vm733, %v726, %v730
  %v735 = vand.u32 2147483647, %v725
  %vm736 = vcmp.eq.f32.partialorder %v735, 8.507059e+37
  %v737 = vand.u32 %v725, 2147483648
  %v738 = vor.u32 1.1754944e-38, %v737
  %v739 = vsel %vm736, %v738, %v734
  %v740 = vmul.f32 %v715, %v739
  %v741 = vmin.f32 %v740, 1.0
  %v742 = vmax.f32 %v741, -1.0
  %v743 = vmul.f32 %v649, %v649
  %v744 = vmin.f32 16.0, %v743
  %v745 = vmul.f32 %v744, 2.1237322e-06
  %v746 = vadd.f32 %v745, 0.00028619796
  %v747 = vmul.f32 %v744, %v746
  %v748 = vadd.f32 %v747, 0.0036580483
  %v749 = vmul.f32 %v744, %v748
  %v750 = vadd.f32 %v749, 0.05243302
  %v751 = vmul.f32 %v744, %v750
  %v752 = vadd.f32 %v751, 0.18741608
  %v753 = vmul.f32 %v744, %v752
  %v754 = vadd.f32 %v753, 1.1283791
  %v755 = vmul.f32 %v649, %v754
  %v756 = vmul.f32 %v744, 3.8918573e-05
  %v757 = vadd.f32 %v756, 0.001143296
  %v758 = vmul.f32 %v744, %v757
  %v759 = vadd.f32 %v758, 0.014752088
  %v760 = vmul.f32 %v744, %v759
  %v761 = vadd.f32 %v760, 0.112945676
  %v762 = vmul.f32 %v744, %v761
  %v763 = vadd.f32 %v762, 0.4994258
  %v764 = vmul.f32 %v744, %v763
  %v765 = vadd.f32 %v764, 1.0
  %v766 = vrcp.pop %v765
  %v767 = vmul.f32 %v765, %v766
  %v768 = vsub.f32 1.0, %v767
  %v769 = vmul.f32 %v766, %v768
  %v770 = vadd.f32 %v766, %v769
  %vm771 = vweird.f32 %v765
  %vm772 = vweird.f32 %v766
  %vm773 = vmor %vm771, %vm772
  %v774 = vsel %vm773, %v766, %v770
  %v775 = vand.u32 2147483647, %v765
  %vm776 = vcmp.eq.f32.partialorder %v775, 8.507059e+37
  %v777 = vand.u32 %v765, 2147483648
  %v778 = vor.u32 1.1754944e-38, %v777
  %v779 = vsel %vm776, %v778, %v774
  %v780 = vmul.f32 %v755, %v779
  %v781 = vmin.f32 %v780, 1.0
  %v782 = vmax.f32 %v781, -1.0
  %v783 = vmul.f32 %v650, %v650
  %v784 = vmin.f32 16.0, %v783
  %v785 = vmul.f32 %v784, 2.1237322e-06
  %v786 = vadd.f32 %v785, 0.00028619796
  %v787 = vmul.f32 %v784, %v786
  %v788 = vadd.f32 %v787, 0.0036580483
  %v789 = vmul.f32 %v784, %v788
  %v790 = vadd.f32 %v789, 0.05243302
  %v791 = vmul.f32 %v784, %v790
  %v792 = vadd.f32 %v791, 0.18741608
  %v793 = vmul.f32 %v784, %v792
  %v794 = vadd.f32 %v793, 1.1283791
  %v795 = vmul.f32 %v650, %v794
  %v796 = vmul.f32 %v784, 3.8918573e-05
  %v797 = vadd.f32 %v796, 0.001143296
  %v798 = vmul.f32 %v784, %v797
  %v799 = vadd.f32 %v798, 0.014752088
  %v800 = vmul.f32 %v784, %v799
  %v801 = vadd.f32 %v800, 0.112945676
  %v802 = vmul.f32 %v784, %v801
  %v803 = vadd.f32 %v802, 0.4994258
  %v804 = vmul.f32 %v784, %v803
  %v805 = vadd.f32 %v804, 1.0
  %v806 = vrcp.pop %v805
  %v807 = vmul.f32 %v805, %v806
  %v808 = vsub.f32 1.0, %v807
  %v809 = vmul.f32 %v806, %v808
  %v810 = vadd.f32 %v806, %v809
  %vm811 = vweird.f32 %v805
  %vm812 = vweird.f32 %v806
  %vm813 = vmor %vm811, %vm812
  %v814 = vsel %vm813, %v806, %v810
  %v815 = vand.u32 2147483647, %v805
  %vm816 = vcmp.eq.f32.partialorder %v815, 8.507059e+37
  %v817 = vand.u32 %v805, 2147483648
  %v818 = vor.u32 1.1754944e-38, %v817
  %v819 = vsel %vm816, %v818, %v814
  %v820 = vmul.f32 %v795, %v819
  %v821 = vmin.f32 %v820, 1.0
  %v822 = vmax.f32 %v821, -1.0
  %v823 = vmul.f32 %v651, %v651
  %v824 = vmin.f32 16.0, %v823
  %v825 = vmul.f32 %v824, 2.1237322e-06
  %v826 = vadd.f32 %v825, 0.00028619796
  %v827 = vmul.f32 %v824, %v826
  %v828 = vadd.f32 %v827, 0.0036580483
  %v829 = vmul.f32 %v824, %v828
  %v830 = vadd.f32 %v829, 0.05243302
  %v831 = vmul.f32 %v824, %v830
  %v832 = vadd.f32 %v831, 0.18741608
  %v833 = vmul.f32 %v824, %v832
  %v834 = vadd.f32 %v833, 1.1283791
  %v835 = vmul.f32 %v651, %v834
  %v836 = vmul.f32 %v824, 3.8918573e-05
  %v837 = vadd.f32 %v836, 0.001143296
  %v838 = vmul.f32 %v824, %v837
  %v839 = vadd.f32 %v838, 0.014752088
  %v840 = vmul.f32 %v824, %v839
  %v841 = vadd.f32 %v840, 0.112945676
  %v842 = vmul.f32 %v824, %v841
  %v843 = vadd.f32 %v842, 0.4994258
  %v844 = vmul.f32 %v824, %v843
  %v845 = vadd.f32 %v844, 1.0
  %v846 = vrcp.pop %v845
  %v847 = vmul.f32 %v845, %v846
  %v848 = vsub.f32 1.0, %v847
  %v849 = vmul.f32 %v846, %v848
  %v850 = vadd.f32 %v846, %v849
  %vm851 = vweird.f32 %v845
  %vm852 = vweird.f32 %v846
  %vm853 = vmor %vm851, %vm852
  %v854 = vsel %vm853, %v846, %v850
  %v855 = vand.u32 2147483647, %v845
  %vm856 = vcmp.eq.f32.partialorder %v855, 8.507059e+37
  %v857 = vand.u32 %v845, 2147483648
  %v858 = vor.u32 1.1754944e-38, %v857
  %v859 = vsel %vm856, %v858, %v854
  %v860 = vmul.f32 %v835, %v859
  %v861 = vmin.f32 %v860, 1.0
  %v862 = vmax.f32 %v861, -1.0
  %v863 = vmul.f32 %v652, %v652
  %v864 = vmin.f32 16.0, %v863
  %v865 = vmul.f32 %v864, 2.1237322e-06
  %v866 = vadd.f32 %v865, 0.00028619796
  %v867 = vmul.f32 %v864, %v866
  %v868 = vadd.f32 %v867, 0.0036580483
  %v869 = vmul.f32 %v864, %v868
  %v870 = vadd.f32 %v869, 0.05243302
  %v871 = vmul.f32 %v864, %v870
  %v872 = vadd.f32 %v871, 0.18741608
  %v873 = vmul.f32 %v864, %v872
  %v874 = vadd.f32 %v873, 1.1283791
  %v875 = vmul.f32 %v652, %v874
  %v876 = vmul.f32 %v864, 3.8918573e-05
  %v877 = vadd.f32 %v876, 0.001143296
  %v878 = vmul.f32 %v864, %v877
  %v879 = vadd.f32 %v878, 0.014752088
  %v880 = vmul.f32 %v864, %v879
  %v881 = vadd.f32 %v880, 0.112945676
  %v882 = vmul.f32 %v864, %v881
  %v883 = vadd.f32 %v882, 0.4994258
  %v884 = vmul.f32 %v864, %v883
  %v885 = vadd.f32 %v884, 1.0
  %v886 = vrcp.pop %v885
  %v887 = vmul.f32 %v885, %v886
  %v888 = vsub.f32 1.0, %v887
  %v889 = vmul.f32 %v886, %v888
  %v890 = vadd.f32 %v886, %v889
  %vm891 = vweird.f32 %v885
  %vm892 = vweird.f32 %v886
  %vm893 = vmor %vm891, %vm892
  %v894 = vsel %vm893, %v886, %v890
  %v895 = vand.u32 2147483647, %v885
  %vm896 = vcmp.eq.f32.partialorder %v895, 8.507059e+37
  %v897 = vand.u32 %v885, 2147483648
  %v898 = vor.u32 1.1754944e-38, %v897
  %v899 = vsel %vm896, %v898, %v894
  %v900 = vmul.f32 %v875, %v899
  %v901 = vmin.f32 %v900, 1.0
  %v902 = vmax.f32 %v901, -1.0
  %v903 = vmul.f32 %v653, %v653
  %v904 = vmin.f32 16.0, %v903
  %v905 = vmul.f32 %v904, 2.1237322e-06
  %v906 = vadd.f32 %v905, 0.00028619796
  %v907 = vmul.f32 %v904, %v906
  %v908 = vadd.f32 %v907, 0.0036580483
  %v909 = vmul.f32 %v904, %v908
  %v910 = vadd.f32 %v909, 0.05243302
  %v911 = vmul.f32 %v904, %v910
  %v912 = vadd.f32 %v911, 0.18741608
  %v913 = vmul.f32 %v904, %v912
  %v914 = vadd.f32 %v913, 1.1283791
  %v915 = vmul.f32 %v653, %v914
  %v916 = vmul.f32 %v904, 3.8918573e-05
  %v917 = vadd.f32 %v916, 0.001143296
  %v918 = vmul.f32 %v904, %v917
  %v919 = vadd.f32 %v918, 0.014752088
  %v920 = vmul.f32 %v904, %v919
  %v921 = vadd.f32 %v920, 0.112945676
  %v922 = vmul.f32 %v904, %v921
  %v923 = vadd.f32 %v922, 0.4994258
  %v924 = vmul.f32 %v904, %v923
  %v925 = vadd.f32 %v924, 1.0
  %v926 = vrcp.pop %v925
  %v927 = vmul.f32 %v925, %v926
  %v928 = vsub.f32 1.0, %v927
  %v929 = vmul.f32 %v926, %v928
  %v930 = vadd.f32 %v926, %v929
  %vm931 = vweird.f32 %v925
  %vm932 = vweird.f32 %v926
  %vm933 = vmor %vm931, %vm932
  %v934 = vsel %vm933, %v926, %v930
  %v935 = vand.u32 2147483647, %v925
  %vm936 = vcmp.eq.f32.partialorder %v935, 8.507059e+37
  %v937 = vand.u32 %v925, 2147483648
  %v938 = vor.u32 1.1754944e-38, %v937
  %v939 = vsel %vm936, %v938, %v934
  %v940 = vmul.f32 %v915, %v939
  %v941 = vmin.f32 %v940, 1.0
  %v942 = vmax.f32 %v941, -1.0
  %v943 = vmul.f32 %v654, %v654
  %v944 = vmin.f32 16.0, %v943
  %v945 = vmul.f32 %v944, 2.1237322e-06
  %v946 = vadd.f32 %v945, 0.00028619796
  %v947 = vmul.f32 %v944, %v946
  %v948 = vadd.f32 %v947, 0.0036580483
  %v949 = vmul.f32 %v944, %v948
  %v950 = vadd.f32 %v949, 0.05243302
  %v951 = vmul.f32 %v944, %v950
  %v952 = vadd.f32 %v951, 0.18741608
  %v953 = vmul.f32 %v944, %v952
  %v954 = vadd.f32 %v953, 1.1283791
  %v955 = vmul.f32 %v654, %v954
  %v956 = vmul.f32 %v944, 3.8918573e-05
  %v957 = vadd.f32 %v956, 0.001143296
  %v958 = vmul.f32 %v944, %v957
  %v959 = vadd.f32 %v958, 0.014752088
  %v960 = vmul.f32 %v944, %v959
  %v961 = vadd.f32 %v960, 0.112945676
  %v962 = vmul.f32 %v944, %v961
  %v963 = vadd.f32 %v962, 0.4994258
  %v964 = vmul.f32 %v944, %v963
  %v965 = vadd.f32 %v964, 1.0
  %v966 = vrcp.pop %v965
  %v967 = vmul.f32 %v965, %v966
  %v968 = vsub.f32 1.0, %v967
  %v969 = vmul.f32 %v966, %v968
  %v970 = vadd.f32 %v966, %v969
  %vm971 = vweird.f32 %v965
  %vm972 = vweird.f32 %v966
  %vm973 = vmor %vm971, %vm972
  %v974 = vsel %vm973, %v966, %v970
  %v975 = vand.u32 2147483647, %v965
  %vm976 = vcmp.eq.f32.partialorder %v975, 8.507059e+37
  %v977 = vand.u32 %v965, 2147483648
  %v978 = vor.u32 1.1754944e-38, %v977
  %v979 = vsel %vm976, %v978, %v974
  %v980 = vmul.f32 %v955, %v979
  %v981 = vmin.f32 %v980, 1.0
  %v982 = vmax.f32 %v981, -1.0
  %v983 = vmul.f32 %v655, %v655
  %v984 = vmin.f32 16.0, %v983
  %v985 = vmul.f32 %v984, 2.1237322e-06
  %v986 = vadd.f32 %v985, 0.00028619796
  %v987 = vmul.f32 %v984, %v986
  %v988 = vadd.f32 %v987, 0.0036580483
  %v989 = vmul.f32 %v984, %v988
  %v990 = vadd.f32 %v989, 0.05243302
  %v991 = vmul.f32 %v984, %v990
  %v992 = vadd.f32 %v991, 0.18741608
  %v993 = vmul.f32 %v984, %v992
  %v994 = vadd.f32 %v993, 1.1283791
  %v995 = vmul.f32 %v655, %v994
  %v996 = vmul.f32 %v984, 3.8918573e-05
  %v997 = vadd.f32 %v996, 0.001143296
  %v998 = vmul.f32 %v984, %v997
  %v999 = vadd.f32 %v998, 0.014752088
  %v1000 = vmul.f32 %v984, %v999
  %v1001 = vadd.f32 %v1000, 0.112945676
  %v1002 = vmul.f32 %v984, %v1001
  %v1003 = vadd.f32 %v1002, 0.4994258
  %v1004 = vmul.f32 %v984, %v1003
  %v1005 = vadd.f32 %v1004, 1.0
  %v1006 = vrcp.pop %v1005
  %v1007 = vmul.f32 %v1005, %v1006
  %v1008 = vsub.f32 1.0, %v1007
  %v1009 = vmul.f32 %v1006, %v1008
  %v1010 = vadd.f32 %v1006, %v1009
  %vm1011 = vweird.f32 %v1005
  %vm1012 = vweird.f32 %v1006
  %vm1013 = vmor %vm1011, %vm1012
  %v1014 = vsel %vm1013, %v1006, %v1010
  %v1015 = vand.u32 2147483647, %v1005
  %vm1016 = vcmp.eq.f32.partialorder %v1015, 8.507059e+37
  %v1017 = vand.u32 %v1005, 2147483648
  %v1018 = vor.u32 1.1754944e-38, %v1017
  %v1019 = vsel %vm1016, %v1018, %v1014
  %v1020 = vmul.f32 %v995, %v1019
  %v1021 = vmin.f32 %v1020, 1.0
  %v1022 = vmax.f32 %v1021, -1.0
  %v1023 = vmul.f32 %v656, %v656
  %v1024 = vmin.f32 16.0, %v1023
  %v1025 = vmul.f32 %v1024, 2.1237322e-06
  %v1026 = vadd.f32 %v1025, 0.00028619796
  %v1027 = vmul.f32 %v1024, %v1026
  %v1028 = vadd.f32 %v1027, 0.0036580483
  %v1029 = vmul.f32 %v1024, %v1028
  %v1030 = vadd.f32 %v1029, 0.05243302
  %v1031 = vmul.f32 %v1024, %v1030
  %v1032 = vadd.f32 %v1031, 0.18741608
  %v1033 = vmul.f32 %v1024, %v1032
  %v1034 = vadd.f32 %v1033, 1.1283791
  %v1035 = vmul.f32 %v656, %v1034
  %v1036 = vmul.f32 %v1024, 3.8918573e-05
  %v1037 = vadd.f32 %v1036, 0.001143296
  %v1038 = vmul.f32 %v1024, %v1037
  %v1039 = vadd.f32 %v1038, 0.014752088
  %v1040 = vmul.f32 %v1024, %v1039
  %v1041 = vadd.f32 %v1040, 0.112945676
  %v1042 = vmul.f32 %v1024, %v1041
  %v1043 = vadd.f32 %v1042, 0.4994258
  %v1044 = vmul.f32 %v1024, %v1043
  %v1045 = vadd.f32 %v1044, 1.0
  %v1046 = vrcp.pop %v1045
  %v1047 = vmul.f32 %v1045, %v1046
  %v1048 = vsub.f32 1.0, %v1047
  %v1049 = vmul.f32 %v1046, %v1048
  %v1050 = vadd.f32 %v1046, %v1049
  %vm1051 = vweird.f32 %v1045
  %vm1052 = vweird.f32 %v1046
  %vm1053 = vmor %vm1051, %vm1052
  %v1054 = vsel %vm1053, %v1046, %v1050
  %v1055 = vand.u32 2147483647, %v1045
  %vm1056 = vcmp.eq.f32.partialorder %v1055, 8.507059e+37
  %v1057 = vand.u32 %v1045, 2147483648
  %v1058 = vor.u32 1.1754944e-38, %v1057
  %v1059 = vsel %vm1056, %v1058, %v1054
  %v1060 = vmul.f32 %v1035, %v1059
  %v1061 = vmin.f32 %v1060, 1.0
  %v1062 = vmax.f32 %v1061, -1.0
  %v1063 = vmul.f32 %v657, %v657
  %v1064 = vmin.f32 16.0, %v1063
  %v1065 = vmul.f32 %v1064, 2.1237322e-06
  %v1066 = vadd.f32 %v1065, 0.00028619796
  %v1067 = vmul.f32 %v1064, %v1066
  %v1068 = vadd.f32 %v1067, 0.0036580483
  %v1069 = vmul.f32 %v1064, %v1068
  %v1070 = vadd.f32 %v1069, 0.05243302
  %v1071 = vmul.f32 %v1064, %v1070
  %v1072 = vadd.f32 %v1071, 0.18741608
  %v1073 = vmul.f32 %v1064, %v1072
  %v1074 = vadd.f32 %v1073, 1.1283791
  %v1075 = vmul.f32 %v657, %v1074
  %v1076 = vmul.f32 %v1064, 3.8918573e-05
  %v1077 = vadd.f32 %v1076, 0.001143296
  %v1078 = vmul.f32 %v1064, %v1077
  %v1079 = vadd.f32 %v1078, 0.014752088
  %v1080 = vmul.f32 %v1064, %v1079
  %v1081 = vadd.f32 %v1080, 0.112945676
  %v1082 = vmul.f32 %v1064, %v1081
  %v1083 = vadd.f32 %v1082, 0.4994258
  %v1084 = vmul.f32 %v1064, %v1083
  %v1085 = vadd.f32 %v1084, 1.0
  %v1086 = vrcp.pop %v1085
  %v1087 = vmul.f32 %v1085, %v1086
  %v1088 = vsub.f32 1.0, %v1087
  %v1089 = vmul.f32 %v1086, %v1088
  %v1090 = vadd.f32 %v1086, %v1089
  %vm1091 = vweird.f32 %v1085
  %vm1092 = vweird.f32 %v1086
  %vm1093 = vmor %vm1091, %vm1092
  %v1094 = vsel %vm1093, %v1086, %v1090
  %v1095 = vand.u32 2147483647, %v1085
  %vm1096 = vcmp.eq.f32.partialorder %v1095, 8.507059e+37
  %v1097 = vand.u32 %v1085, 2147483648
  %v1098 = vor.u32 1.1754944e-38, %v1097
  %v1099 = vsel %vm1096, %v1098, %v1094
  %v1100 = vmul.f32 %v1075, %v1099
  %v1101 = vmin.f32 %v1100, 1.0
  %v1102 = vmax.f32 %v1101, -1.0
  %v1103 = vmul.f32 %v658, %v658
  %v1104 = vmin.f32 16.0, %v1103
  %v1105 = vmul.f32 %v1104, 2.1237322e-06
  %v1106 = vadd.f32 %v1105, 0.00028619796
  %v1107 = vmul.f32 %v1104, %v1106
  %v1108 = vadd.f32 %v1107, 0.0036580483
  %v1109 = vmul.f32 %v1104, %v1108
  %v1110 = vadd.f32 %v1109, 0.05243302
  %v1111 = vmul.f32 %v1104, %v1110
  %v1112 = vadd.f32 %v1111, 0.18741608
  %v1113 = vmul.f32 %v1104, %v1112
  %v1114 = vadd.f32 %v1113, 1.1283791
  %v1115 = vmul.f32 %v658, %v1114
  %v1116 = vmul.f32 %v1104, 3.8918573e-05
  %v1117 = vadd.f32 %v1116, 0.001143296
  %v1118 = vmul.f32 %v1104, %v1117
  %v1119 = vadd.f32 %v1118, 0.014752088
  %v1120 = vmul.f32 %v1104, %v1119
  %v1121 = vadd.f32 %v1120, 0.112945676
  %v1122 = vmul.f32 %v1104, %v1121
  %v1123 = vadd.f32 %v1122, 0.4994258
  %v1124 = vmul.f32 %v1104, %v1123
  %v1125 = vadd.f32 %v1124, 1.0
  %v1126 = vrcp.pop %v1125
  %v1127 = vmul.f32 %v1125, %v1126
  %v1128 = vsub.f32 1.0, %v1127
  %v1129 = vmul.f32 %v1126, %v1128
  %v1130 = vadd.f32 %v1126, %v1129
  %vm1131 = vweird.f32 %v1125
  %vm1132 = vweird.f32 %v1126
  %vm1133 = vmor %vm1131, %vm1132
  %v1134 = vsel %vm1133, %v1126, %v1130
  %v1135 = vand.u32 2147483647, %v1125
  %vm1136 = vcmp.eq.f32.partialorder %v1135, 8.507059e+37
  %v1137 = vand.u32 %v1125, 2147483648
  %v1138 = vor.u32 1.1754944e-38, %v1137
  %v1139 = vsel %vm1136, %v1138, %v1134
  %v1140 = vmul.f32 %v1115, %v1139
  %v1141 = vmin.f32 %v1140, 1.0
  %v1142 = vmax.f32 %v1141, -1.0
  %v1143 = vmul.f32 %v659, %v659
  %v1144 = vmin.f32 16.0, %v1143
  %v1145 = vmul.f32 %v1144, 2.1237322e-06
  %v1146 = vadd.f32 %v1145, 0.00028619796
  %v1147 = vmul.f32 %v1144, %v1146
  %v1148 = vadd.f32 %v1147, 0.0036580483
  %v1149 = vmul.f32 %v1144, %v1148
  %v1150 = vadd.f32 %v1149, 0.05243302
  %v1151 = vmul.f32 %v1144, %v1150
  %v1152 = vadd.f32 %v1151, 0.18741608
  %v1153 = vmul.f32 %v1144, %v1152
  %v1154 = vadd.f32 %v1153, 1.1283791
  %v1155 = vmul.f32 %v659, %v1154
  %v1156 = vmul.f32 %v1144, 3.8918573e-05
  %v1157 = vadd.f32 %v1156, 0.001143296
  %v1158 = vmul.f32 %v1144, %v1157
  %v1159 = vadd.f32 %v1158, 0.014752088
  %v1160 = vmul.f32 %v1144, %v1159
  %v1161 = vadd.f32 %v1160, 0.112945676
  %v1162 = vmul.f32 %v1144, %v1161
  %v1163 = vadd.f32 %v1162, 0.4994258
  %v1164 = vmul.f32 %v1144, %v1163
  %v1165 = vadd.f32 %v1164, 1.0
  %v1166 = vrcp.pop %v1165
  %v1167 = vmul.f32 %v1165, %v1166
  %v1168 = vsub.f32 1.0, %v1167
  %v1169 = vmul.f32 %v1166, %v1168
  %v1170 = vadd.f32 %v1166, %v1169
  %vm1171 = vweird.f32 %v1165
  %vm1172 = vweird.f32 %v1166
  %vm1173 = vmor %vm1171, %vm1172
  %v1174 = vsel %vm1173, %v1166, %v1170
  %v1175 = vand.u32 2147483647, %v1165
  %vm1176 = vcmp.eq.f32.partialorder %v1175, 8.507059e+37
  %v1177 = vand.u32 %v1165, 2147483648
  %v1178 = vor.u32 1.1754944e-38, %v1177
  %v1179 = vsel %vm1176, %v1178, %v1174
  %v1180 = vmul.f32 %v1155, %v1179
  %v1181 = vmin.f32 %v1180, 1.0
  %v1182 = vmax.f32 %v1181, -1.0
  %v1183 = vmul.f32 %v660, %v660
  %v1184 = vmin.f32 16.0, %v1183
  %v1185 = vmul.f32 %v1184, 2.1237322e-06
  %v1186 = vadd.f32 %v1185, 0.00028619796
  %v1187 = vmul.f32 %v1184, %v1186
  %v1188 = vadd.f32 %v1187, 0.0036580483
  %v1189 = vmul.f32 %v1184, %v1188
  %v1190 = vadd.f32 %v1189, 0.05243302
  %v1191 = vmul.f32 %v1184, %v1190
  %v1192 = vadd.f32 %v1191, 0.18741608
  %v1193 = vmul.f32 %v1184, %v1192
  %v1194 = vadd.f32 %v1193, 1.1283791
  %v1195 = vmul.f32 %v660, %v1194
  %v1196 = vmul.f32 %v1184, 3.8918573e-05
  %v1197 = vadd.f32 %v1196, 0.001143296
  %v1198 = vmul.f32 %v1184, %v1197
  %v1199 = vadd.f32 %v1198, 0.014752088
  %v1200 = vmul.f32 %v1184, %v1199
  %v1201 = vadd.f32 %v1200, 0.112945676
  %v1202 = vmul.f32 %v1184, %v1201
  %v1203 = vadd.f32 %v1202, 0.4994258
  %v1204 = vmul.f32 %v1184, %v1203
  %v1205 = vadd.f32 %v1204, 1.0
  %v1206 = vrcp.pop %v1205
  %v1207 = vmul.f32 %v1205, %v1206
  %v1208 = vsub.f32 1.0, %v1207
  %v1209 = vmul.f32 %v1206, %v1208
  %v1210 = vadd.f32 %v1206, %v1209
  %vm1211 = vweird.f32 %v1205
  %vm1212 = vweird.f32 %v1206
  %vm1213 = vmor %vm1211, %vm1212
  %v1214 = vsel %vm1213, %v1206, %v1210
  %v1215 = vand.u32 2147483647, %v1205
  %vm1216 = vcmp.eq.f32.partialorder %v1215, 8.507059e+37
  %v1217 = vand.u32 %v1205, 2147483648
  %v1218 = vor.u32 1.1754944e-38, %v1217
  %v1219 = vsel %vm1216, %v1218, %v1214
  %v1220 = vmul.f32 %v1195, %v1219
  %v1221 = vmin.f32 %v1220, 1.0
  %v1222 = vmax.f32 %v1221, -1.0
  %v1223 = vmul.f32 %v661, %v661
  %v1224 = vmin.f32 16.0, %v1223
  %v1225 = vmul.f32 %v1224, 2.1237322e-06
  %v1226 = vadd.f32 %v1225, 0.00028619796
  %v1227 = vmul.f32 %v1224, %v1226
  %v1228 = vadd.f32 %v1227, 0.0036580483
  %v1229 = vmul.f32 %v1224, %v1228
  %v1230 = vadd.f32 %v1229, 0.05243302
  %v1231 = vmul.f32 %v1224, %v1230
  %v1232 = vadd.f32 %v1231, 0.18741608
  %v1233 = vmul.f32 %v1224, %v1232
  %v1234 = vadd.f32 %v1233, 1.1283791
  %v1235 = vmul.f32 %v661, %v1234
  %v1236 = vmul.f32 %v1224, 3.8918573e-05
  %v1237 = vadd.f32 %v1236, 0.001143296
  %v1238 = vmul.f32 %v1224, %v1237
  %v1239 = vadd.f32 %v1238, 0.014752088
  %v1240 = vmul.f32 %v1224, %v1239
  %v1241 = vadd.f32 %v1240, 0.112945676
  %v1242 = vmul.f32 %v1224, %v1241
  %v1243 = vadd.f32 %v1242, 0.4994258
  %v1244 = vmul.f32 %v1224, %v1243
  %v1245 = vadd.f32 %v1244, 1.0
  %v1246 = vrcp.pop %v1245
  %v1247 = vmul.f32 %v1245, %v1246
  %v1248 = vsub.f32 1.0, %v1247
  %v1249 = vmul.f32 %v1246, %v1248
  %v1250 = vadd.f32 %v1246, %v1249
  %vm1251 = vweird.f32 %v1245
  %vm1252 = vweird.f32 %v1246
  %vm1253 = vmor %vm1251, %vm1252
  %v1254 = vsel %vm1253, %v1246, %v1250
  %v1255 = vand.u32 2147483647, %v1245
  %vm1256 = vcmp.eq.f32.partialorder %v1255, 8.507059e+37
  %v1257 = vand.u32 %v1245, 2147483648
  %v1258 = vor.u32 1.1754944e-38, %v1257
  %v1259 = vsel %vm1256, %v1258, %v1254
  %v1260 = vmul.f32 %v1235, %v1259
  %v1261 = vmin.f32 %v1260, 1.0
  %v1262 = vmax.f32 %v1261, -1.0
  %v1263 = vmul.f32 %v662, %v662
  %v1264 = vmin.f32 16.0, %v1263
  %v1265 = vmul.f32 %v1264, 2.1237322e-06
  %v1266 = vadd.f32 %v1265, 0.00028619796
  %v1267 = vmul.f32 %v1264, %v1266
  %v1268 = vadd.f32 %v1267, 0.0036580483
  %v1269 = vmul.f32 %v1264, %v1268
  %v1270 = vadd.f32 %v1269, 0.05243302
  %v1271 = vmul.f32 %v1264, %v1270
  %v1272 = vadd.f32 %v1271, 0.18741608
  %v1273 = vmul.f32 %v1264, %v1272
  %v1274 = vadd.f32 %v1273, 1.1283791
  %v1275 = vmul.f32 %v662, %v1274
  %v1276 = vmul.f32 %v1264, 3.8918573e-05
  %v1277 = vadd.f32 %v1276, 0.001143296
  %v1278 = vmul.f32 %v1264, %v1277
  %v1279 = vadd.f32 %v1278, 0.014752088
  %v1280 = vmul.f32 %v1264, %v1279
  %v1281 = vadd.f32 %v1280, 0.112945676
  %v1282 = vmul.f32 %v1264, %v1281
  %v1283 = vadd.f32 %v1282, 0.4994258
  %v1284 = vmul.f32 %v1264, %v1283
  %v1285 = vadd.f32 %v1284, 1.0
  %v1286 = vrcp.pop %v1285
  %v1287 = vmul.f32 %v1285, %v1286
  %v1288 = vsub.f32 1.0, %v1287
  %v1289 = vmul.f32 %v1286, %v1288
  %v1290 = vadd.f32 %v1286, %v1289
  %vm1291 = vweird.f32 %v1285
  %vm1292 = vweird.f32 %v1286
  %vm1293 = vmor %vm1291, %vm1292
  %v1294 = vsel %vm1293, %v1286, %v1290
  %v1295 = vand.u32 2147483647, %v1285
  %vm1296 = vcmp.eq.f32.partialorder %v1295, 8.507059e+37
  %v1297 = vand.u32 %v1285, 2147483648
  %v1298 = vor.u32 1.1754944e-38, %v1297
  %v1299 = vsel %vm1296, %v1298, %v1294
  %v1300 = vmul.f32 %v1275, %v1299
  %v1301 = vmin.f32 %v1300, 1.0
  %v1302 = vmax.f32 %v1301, -1.0
  %v1303 = vadd.f32 %v702, 1.0
  %v1304 = vadd.f32 %v742, 1.0
  %v1305 = vadd.f32 %v782, 1.0
  %v1306 = vadd.f32 %v822, 1.0
  %v1307 = vadd.f32 %v862, 1.0
  %v1308 = vadd.f32 %v902, 1.0
  %v1309 = vadd.f32 %v942, 1.0
  %v1310 = vadd.f32 %v982, 1.0
  %v1311 = vadd.f32 %v1022, 1.0
  %v1312 = vadd.f32 %v1062, 1.0
  %v1313 = vadd.f32 %v1102, 1.0
  %v1314 = vadd.f32 %v1142, 1.0
  %v1315 = vadd.f32 %v1182, 1.0
  %v1316 = vadd.f32 %v1222, 1.0
  %v1317 = vadd.f32 %v1262, 1.0
  %v1318 = vadd.f32 %v1302, 1.0
  %v1319 = vmul.f32 %v631, %v1303
  %v1320 = vmul.f32 %v632, %v1304
  %v1321 = vmul.f32 %v633, %v1305
  %v1322 = vmul.f32 %v634, %v1306
  %v1323 = vmul.f32 %v635, %v1307
  %v1324 = vmul.f32 %v636, %v1308
  %v1325 = vmul.f32 %v637, %v1309
  %v1326 = vmul.f32 %v638, %v1310
  %v1327 = vmul.f32 %v639, %v1311
  %v1328 = vmul.f32 %v640, %v1312
  %v1329 = vmul.f32 %v641, %v1313
  %v1330 = vmul.f32 %v642, %v1314
  %v1331 = vmul.f32 %v643, %v1315
  %v1332 = vmul.f32 %v644, %v1316
  %v1333 = vmul.f32 %v645, %v1317
  %v1334 = vmul.f32 %v646, %v1318
  %v1335 = vpack.c.bf16 %v1320, %v1319
  %v1336 = vpack.c.bf16 %v1322, %v1321
  %v1337 = vpack.c.bf16 %v1324, %v1323
  %v1338 = vpack.c.bf16 %v1326, %v1325
  %v1339 = vpack.c.bf16 %v1328, %v1327
  %v1340 = vpack.c.bf16 %v1330, %v1329
  %v1341 = vpack.c.bf16 %v1332, %v1331
  %v1342 = vpack.c.bf16 %v1334, %v1333
  %v1343 = vperm.slane %v44, 5
  %v1348 = vunpack.c.l.b16 %v57
  %v1349 = vunpack.c.l.b16 %v58
  %v1350 = vunpack.c.l.b16 %v59
  %v1351 = vunpack.c.l.b16 %v60
  %v1352 = vpack.c.b16 %v1349, %v1348
  %v1353 = vpack.c.b16 %v1351, %v1350
  %v1357 = vsel %vm75, %v1335, 0
  %v1360 = vsel %vm75, %v1336, 0
  %v1363 = vsel %vm75, %v1337, 0
  %v1366 = vsel %vm75, %v1338, 0
  %v1369 = vsel %vm75, %v1339, 0
  %v1372 = vsel %vm75, %v1340, 0
  %v1375 = vsel %vm75, %v1341, 0
  %v1378 = vsel %vm75, %v1342, 0
  %1380 = vmatpush.bf16.msra.mxu0 0
  %1381 = vmatpush.bf16.msra.mxu0 0
  %1382 = vmatpush.bf16.msra.mxu0 0
  %1383 = vmatpush.bf16.msra.mxu0 0
  %1384 = vmatpush.bf16.msra.mxu0 0
  %1385 = vmatpush.bf16.msra.mxu0 0
  %1386 = vmatpush.bf16.msra.mxu0 %v1353
  %1387 = vmatpush.bf16.msra.mxu0 %v1352
  %1388 = vmatmul.bf16.gmra.mxu0 %v1357
  %v1389 = vpop.f32.mrf.mxu0
  %v1390 = vadd.f32 %v1343, %v1389
  %v1391 = vpop.f32.mrf.mxu0
  %v1392 = vadd.f32 %v1343, %v1391
  %1393 = vmatmul.bf16.gmra.mxu0 %v1360
  %v1394 = vpop.f32.mrf.mxu0
  %v1395 = vadd.f32 %v1343, %v1394
  %v1396 = vpop.f32.mrf.mxu0
  %v1397 = vadd.f32 %v1343, %v1396
  %1398 = vmatmul.bf16.gmra.mxu0 %v1363
  %v1399 = vpop.f32.mrf.mxu0
  %v1400 = vadd.f32 %v1343, %v1399
  %v1401 = vpop.f32.mrf.mxu0
  %v1402 = vadd.f32 %v1343, %v1401
  %1403 = vmatmul.bf16.gmra.mxu0 %v1366
  %v1404 = vpop.f32.mrf.mxu0
  %v1405 = vadd.f32 %v1343, %v1404
  %v1406 = vpop.f32.mrf.mxu0
  %v1407 = vadd.f32 %v1343, %v1406
  %1408 = vmatmul.bf16.gmra.mxu0 %v1369
  %v1409 = vpop.f32.mrf.mxu0
  %v1410 = vadd.f32 %v1343, %v1409
  %v1411 = vpop.f32.mrf.mxu0
  %v1412 = vadd.f32 %v1343, %v1411
  %1413 = vmatmul.bf16.gmra.mxu0 %v1372
  %v1414 = vpop.f32.mrf.mxu0
  %v1415 = vadd.f32 %v1343, %v1414
  %v1416 = vpop.f32.mrf.mxu0
  %v1417 = vadd.f32 %v1343, %v1416
  %1418 = vmatmul.bf16.gmra.mxu0 %v1375
  %v1419 = vpop.f32.mrf.mxu0
  %v1420 = vadd.f32 %v1343, %v1419
  %v1421 = vpop.f32.mrf.mxu0
  %v1422 = vadd.f32 %v1343, %v1421
  %1423 = vmatmul.bf16.gmra.mxu0 %v1378
  %v1424 = vpop.f32.mrf.mxu0
  %v1425 = vadd.f32 %v1343, %v1424
  %v1426 = vpop.f32.mrf.mxu0
  %v1427 = vadd.f32 %v1343, %v1426
  %1428 = vdwg.mxu0
  %v1429 = vadd.f32 %v128, %v1390
  %v1430 = vadd.f32 %v129, %v1392
  %v1431 = vadd.f32 %v130, %v1395
  %v1432 = vadd.f32 %v131, %v1397
  %v1433 = vadd.f32 %v132, %v1400
  %v1434 = vadd.f32 %v133, %v1402
  %v1435 = vadd.f32 %v134, %v1405
  %v1436 = vadd.f32 %v135, %v1407
  %v1437 = vadd.f32 %v136, %v1410
  %v1438 = vadd.f32 %v137, %v1412
  %v1439 = vadd.f32 %v138, %v1415
  %v1440 = vadd.f32 %v139, %v1417
  %v1441 = vadd.f32 %v140, %v1420
  %v1442 = vadd.f32 %v141, %v1422
  %v1443 = vadd.f32 %v142, %v1425
  %v1444 = vadd.f32 %v143, %v1427
  %s1445 = scalar_lea.vmem %s6, 8
  %v1446 = vld [vmem:[%s1445] sm:$0xff]
  %s1447 = scalar_lea.vmem %s2, 16
  %v1448 = vld [vmem:[%s1447] sm:$0xf]
  %v1449 = vld [vmem:[%s1447 + $0x4] sm:$0xf]
  %v1450 = vld [vmem:[%s1447 + $0x8] sm:$0xf]
  %v1451 = vld [vmem:[%s1447 + $0xc] sm:$0xf]
  %s1452 = scalar_lea.vmem %s3, 16
  %v1453 = vld [vmem:[%s1452] sm:$0xf]
  %v1454 = vld [vmem:[%s1452 + $0x4] sm:$0xf]
  %v1455 = vld [vmem:[%s1452 + $0x8] sm:$0xf]
  %v1456 = vld [vmem:[%s1452 + $0xc] sm:$0xf]
  %s1457 = scalar_lea.vmem %s4, 16
  %v1458 = vld [vmem:[%s1457] sm:$0xf]
  %v1459 = vld [vmem:[%s1457 + $0x4] sm:$0xf]
  %v1460 = vld [vmem:[%s1457 + $0x8] sm:$0xf]
  %v1461 = vld [vmem:[%s1457 + $0xc] sm:$0xf]
  %s1462 = scalar_lea.vmem %s5, 16
  %v1463 = vld [vmem:[%s1462] sm:$0xf]
  %v1464 = vld [vmem:[%s1462 + $0x4] sm:$0xf]
  %v1465 = vld [vmem:[%s1462 + $0x8] sm:$0xf]
  %v1466 = vld [vmem:[%s1462 + $0xc] sm:$0xf]
  %v1467 = vperm.slane %v1446, 2
  %v1472 = vunpack.c.l.b16 %v1448
  %v1473 = vunpack.c.l.b16 %v1449
  %v1474 = vunpack.c.l.b16 %v1450
  %v1475 = vunpack.c.l.b16 %v1451
  %v1476 = vpack.c.b16 %v1473, %v1472
  %v1477 = vpack.c.b16 %v1475, %v1474
  %1480 = vmatpush.bf16.msra.mxu0 0
  %1481 = vmatpush.bf16.msra.mxu0 0
  %1482 = vmatpush.bf16.msra.mxu0 0
  %1483 = vmatpush.bf16.msra.mxu0 0
  %1484 = vmatpush.bf16.msra.mxu0 0
  %1485 = vmatpush.bf16.msra.mxu0 0
  %1486 = vmatpush.bf16.msra.mxu0 %v1477
  %1487 = vmatpush.bf16.msra.mxu0 %v1476
  %1488 = vmatmul.bf16.gmra.mxu0 %v77
  %v1489 = vpop.f32.mrf.mxu0
  %v1490 = vadd.f32 %v1467, %v1489
  %v1491 = vpop.f32.mrf.mxu0
  %1492 = vdwg.mxu0
  %v1493 = vpack.c.bf16 %v1490, %v1490
  %v1494 = vperm.slane %v1446, 3
  %v1499 = vunpack.c.l.b16 %v1453
  %v1500 = vunpack.c.l.b16 %v1454
  %v1501 = vunpack.c.l.b16 %v1455
  %v1502 = vunpack.c.l.b16 %v1456
  %v1503 = vpack.c.b16 %v1500, %v1499
  %v1504 = vpack.c.b16 %v1502, %v1501
  %v1508 = vsel %vm75, %v1493, 0
  %1510 = vmatpush.bf16.msra.mxu0 0
  %1511 = vmatpush.bf16.msra.mxu0 0
  %1512 = vmatpush.bf16.msra.mxu0 0
  %1513 = vmatpush.bf16.msra.mxu0 0
  %1514 = vmatpush.bf16.msra.mxu0 0
  %1515 = vmatpush.bf16.msra.mxu0 0
  %1516 = vmatpush.bf16.msra.mxu0 %v1504
  %1517 = vmatpush.bf16.msra.mxu0 %v1503
  %1518 = vmatmul.bf16.gmra.mxu0 %v1508
  %v1519 = vpop.f32.mrf.mxu0
  %v1520 = vadd.f32 %v1494, %v1519
  %v1521 = vpop.f32.mrf.mxu0
  %1522 = vdwg.mxu0
  %v1524 = vrot.slane %v1520, 1
  %v1525 = vperm.slane %v1520, 0
  %v1526 = vperm.slane %v1524, 0
  %v1529 = vadd.f32 %v1429, %v1525
  %v1530 = vadd.f32 %v1430, %v1525
  %v1531 = vadd.f32 %v1431, %v1525
  %v1532 = vadd.f32 %v1432, %v1525
  %v1533 = vadd.f32 %v1433, %v1525
  %v1534 = vadd.f32 %v1434, %v1525
  %v1535 = vadd.f32 %v1435, %v1525
  %v1536 = vadd.f32 %v1436, %v1525
  %v1537 = vadd.f32 %v1437, %v1526
  %v1538 = vadd.f32 %v1438, %v1526
  %v1539 = vadd.f32 %v1439, %v1526
  %v1540 = vadd.f32 %v1440, %v1526
  %v1541 = vadd.f32 %v1441, %v1526
  %v1542 = vadd.f32 %v1442, %v1526
  %v1543 = vadd.f32 %v1443, %v1526
  %v1544 = vadd.f32 %v1444, %v1526
  %v1545 = vsel %vm75, %v1529, 0.0
  %1546 = vadd.xlane.f32.xlu0 %v1545
  %v1547 = vpop.xlane.xlu0 %1546
  %v1548 = vsel %vm75, %v1530, 0.0
  %1549 = vadd.xlane.f32.xlu0 %v1548
  %v1550 = vpop.xlane.xlu0 %1549
  %v1551 = vsel %vm75, %v1531, 0.0
  %1552 = vadd.xlane.f32.xlu0 %v1551
  %v1553 = vpop.xlane.xlu0 %1552
  %v1554 = vsel %vm75, %v1532, 0.0
  %1555 = vadd.xlane.f32.xlu0 %v1554
  %v1556 = vpop.xlane.xlu0 %1555
  %v1557 = vsel %vm75, %v1533, 0.0
  %1558 = vadd.xlane.f32.xlu0 %v1557
  %v1559 = vpop.xlane.xlu0 %1558
  %v1560 = vsel %vm75, %v1534, 0.0
  %1561 = vadd.xlane.f32.xlu0 %v1560
  %v1562 = vpop.xlane.xlu0 %1561
  %v1563 = vsel %vm75, %v1535, 0.0
  %1564 = vadd.xlane.f32.xlu0 %v1563
  %v1565 = vpop.xlane.xlu0 %1564
  %v1566 = vsel %vm75, %v1536, 0.0
  %1567 = vadd.xlane.f32.xlu0 %v1566
  %v1568 = vpop.xlane.xlu0 %1567
  %v1569 = vsel %vm75, %v1537, 0.0
  %1570 = vadd.xlane.f32.xlu0 %v1569
  %v1571 = vpop.xlane.xlu0 %1570
  %v1572 = vsel %vm75, %v1538, 0.0
  %1573 = vadd.xlane.f32.xlu0 %v1572
  %v1574 = vpop.xlane.xlu0 %1573
  %v1575 = vsel %vm75, %v1539, 0.0
  %1576 = vadd.xlane.f32.xlu0 %v1575
  %v1577 = vpop.xlane.xlu0 %1576
  %v1578 = vsel %vm75, %v1540, 0.0
  %1579 = vadd.xlane.f32.xlu0 %v1578
  %v1580 = vpop.xlane.xlu0 %1579
  %v1581 = vsel %vm75, %v1541, 0.0
  %1582 = vadd.xlane.f32.xlu0 %v1581
  %v1583 = vpop.xlane.xlu0 %1582
  %v1584 = vsel %vm75, %v1542, 0.0
  %1585 = vadd.xlane.f32.xlu0 %v1584
  %v1586 = vpop.xlane.xlu0 %1585
  %v1587 = vsel %vm75, %v1543, 0.0
  %1588 = vadd.xlane.f32.xlu0 %v1587
  %v1589 = vpop.xlane.xlu0 %1588
  %v1590 = vsel %vm75, %v1544, 0.0
  %1591 = vadd.xlane.f32.xlu0 %v1590
  %v1592 = vpop.xlane.xlu0 %1591
  %v1593 = vmul.f32 %v1547, %v198
  %v1594 = vmul.f32 %v1550, %v198
  %v1595 = vmul.f32 %v1553, %v198
  %v1596 = vmul.f32 %v1556, %v198
  %v1597 = vmul.f32 %v1559, %v198
  %v1598 = vmul.f32 %v1562, %v198
  %v1599 = vmul.f32 %v1565, %v198
  %v1600 = vmul.f32 %v1568, %v198
  %v1601 = vmul.f32 %v1571, %v198
  %v1602 = vmul.f32 %v1574, %v198
  %v1603 = vmul.f32 %v1577, %v198
  %v1604 = vmul.f32 %v1580, %v198
  %v1605 = vmul.f32 %v1583, %v198
  %v1606 = vmul.f32 %v1586, %v198
  %v1607 = vmul.f32 %v1589, %v198
  %v1608 = vmul.f32 %v1592, %v198
  %v1609 = vsub.f32 %v1529, %v1593
  %v1610 = vsub.f32 %v1530, %v1594
  %v1611 = vsub.f32 %v1531, %v1595
  %v1612 = vsub.f32 %v1532, %v1596
  %v1613 = vsub.f32 %v1533, %v1597
  %v1614 = vsub.f32 %v1534, %v1598
  %v1615 = vsub.f32 %v1535, %v1599
  %v1616 = vsub.f32 %v1536, %v1600
  %v1617 = vsub.f32 %v1537, %v1601
  %v1618 = vsub.f32 %v1538, %v1602
  %v1619 = vsub.f32 %v1539, %v1603
  %v1620 = vsub.f32 %v1540, %v1604
  %v1621 = vsub.f32 %v1541, %v1605
  %v1622 = vsub.f32 %v1542, %v1606
  %v1623 = vsub.f32 %v1543, %v1607
  %v1624 = vsub.f32 %v1544, %v1608
  %v1625 = vmul.f32 %v1609, %v1609
  %v1626 = vmul.f32 %v1610, %v1610
  %v1627 = vmul.f32 %v1611, %v1611
  %v1628 = vmul.f32 %v1612, %v1612
  %v1629 = vmul.f32 %v1613, %v1613
  %v1630 = vmul.f32 %v1614, %v1614
  %v1631 = vmul.f32 %v1615, %v1615
  %v1632 = vmul.f32 %v1616, %v1616
  %v1633 = vmul.f32 %v1617, %v1617
  %v1634 = vmul.f32 %v1618, %v1618
  %v1635 = vmul.f32 %v1619, %v1619
  %v1636 = vmul.f32 %v1620, %v1620
  %v1637 = vmul.f32 %v1621, %v1621
  %v1638 = vmul.f32 %v1622, %v1622
  %v1639 = vmul.f32 %v1623, %v1623
  %v1640 = vmul.f32 %v1624, %v1624
  %v1641 = vsel %vm75, %v1625, 0.0
  %1642 = vadd.xlane.f32.xlu0 %v1641
  %v1643 = vpop.xlane.xlu0 %1642
  %v1644 = vsel %vm75, %v1626, 0.0
  %1645 = vadd.xlane.f32.xlu0 %v1644
  %v1646 = vpop.xlane.xlu0 %1645
  %v1647 = vsel %vm75, %v1627, 0.0
  %1648 = vadd.xlane.f32.xlu0 %v1647
  %v1649 = vpop.xlane.xlu0 %1648
  %v1650 = vsel %vm75, %v1628, 0.0
  %1651 = vadd.xlane.f32.xlu0 %v1650
  %v1652 = vpop.xlane.xlu0 %1651
  %v1653 = vsel %vm75, %v1629, 0.0
  %1654 = vadd.xlane.f32.xlu0 %v1653
  %v1655 = vpop.xlane.xlu0 %1654
  %v1656 = vsel %vm75, %v1630, 0.0
  %1657 = vadd.xlane.f32.xlu0 %v1656
  %v1658 = vpop.xlane.xlu0 %1657
  %v1659 = vsel %vm75, %v1631, 0.0
  %1660 = vadd.xlane.f32.xlu0 %v1659
  %v1661 = vpop.xlane.xlu0 %1660
  %v1662 = vsel %vm75, %v1632, 0.0
  %1663 = vadd.xlane.f32.xlu0 %v1662
  %v1664 = vpop.xlane.xlu0 %1663
  %v1665 = vsel %vm75, %v1633, 0.0
  %1666 = vadd.xlane.f32.xlu0 %v1665
  %v1667 = vpop.xlane.xlu0 %1666
  %v1668 = vsel %vm75, %v1634, 0.0
  %1669 = vadd.xlane.f32.xlu0 %v1668
  %v1670 = vpop.xlane.xlu0 %1669
  %v1671 = vsel %vm75, %v1635, 0.0
  %1672 = vadd.xlane.f32.xlu0 %v1671
  %v1673 = vpop.xlane.xlu0 %1672
  %v1674 = vsel %vm75, %v1636, 0.0
  %1675 = vadd.xlane.f32.xlu0 %v1674
  %v1676 = vpop.xlane.xlu0 %1675
  %v1677 = vsel %vm75, %v1637, 0.0
  %1678 = vadd.xlane.f32.xlu0 %v1677
  %v1679 = vpop.xlane.xlu0 %1678
  %v1680 = vsel %vm75, %v1638, 0.0
  %1681 = vadd.xlane.f32.xlu0 %v1680
  %v1682 = vpop.xlane.xlu0 %1681
  %v1683 = vsel %vm75, %v1639, 0.0
  %1684 = vadd.xlane.f32.xlu0 %v1683
  %v1685 = vpop.xlane.xlu0 %1684
  %v1686 = vsel %vm75, %v1640, 0.0
  %1687 = vadd.xlane.f32.xlu0 %v1686
  %v1688 = vpop.xlane.xlu0 %1687
  %v1689 = vmul.f32 %v1643, %v198
  %v1690 = vmul.f32 %v1646, %v198
  %v1691 = vmul.f32 %v1649, %v198
  %v1692 = vmul.f32 %v1652, %v198
  %v1693 = vmul.f32 %v1655, %v198
  %v1694 = vmul.f32 %v1658, %v198
  %v1695 = vmul.f32 %v1661, %v198
  %v1696 = vmul.f32 %v1664, %v198
  %v1697 = vmul.f32 %v1667, %v198
  %v1698 = vmul.f32 %v1670, %v198
  %v1699 = vmul.f32 %v1673, %v198
  %v1700 = vmul.f32 %v1676, %v198
  %v1701 = vmul.f32 %v1679, %v198
  %v1702 = vmul.f32 %v1682, %v198
  %v1703 = vmul.f32 %v1685, %v198
  %v1704 = vmul.f32 %v1688, %v198
  %v1705 = vadd.f32 %v1689, 1e-05
  %v1706 = vadd.f32 %v1690, 1e-05
  %v1707 = vadd.f32 %v1691, 1e-05
  %v1708 = vadd.f32 %v1692, 1e-05
  %v1709 = vadd.f32 %v1693, 1e-05
  %v1710 = vadd.f32 %v1694, 1e-05
  %v1711 = vadd.f32 %v1695, 1e-05
  %v1712 = vadd.f32 %v1696, 1e-05
  %v1713 = vadd.f32 %v1697, 1e-05
  %v1714 = vadd.f32 %v1698, 1e-05
  %v1715 = vadd.f32 %v1699, 1e-05
  %v1716 = vadd.f32 %v1700, 1e-05
  %v1717 = vadd.f32 %v1701, 1e-05
  %v1718 = vadd.f32 %v1702, 1e-05
  %v1719 = vadd.f32 %v1703, 1e-05
  %v1720 = vadd.f32 %v1704, 1e-05
  %v1721 = vrsqrt.pop %v1705
  %v1722 = vmul.f32 %v1721, %v1705
  %v1723 = vmul.f32 %v1722, %v1721
  %v1724 = vmul.f32 0.5, %v1723
  %v1725 = vsub.f32 1.5, %v1724
  %v1726 = vmul.f32 %v1721, %v1725
  %vm1727 = vweird.f32 %v1705
  %vm1728 = vweird.f32 %v1721
  %vm1729 = vmor %vm1727, %vm1728
  %v1730 = vsel %vm1729, %v1721, %v1726
  %v1731 = vrsqrt.pop %v1706
  %v1732 = vmul.f32 %v1731, %v1706
  %v1733 = vmul.f32 %v1732, %v1731
  %v1734 = vmul.f32 0.5, %v1733
  %v1735 = vsub.f32 1.5, %v1734
  %v1736 = vmul.f32 %v1731, %v1735
  %vm1737 = vweird.f32 %v1706
  %vm1738 = vweird.f32 %v1731
  %vm1739 = vmor %vm1737, %vm1738
  %v1740 = vsel %vm1739, %v1731, %v1736
  %v1741 = vrsqrt.pop %v1707
  %v1742 = vmul.f32 %v1741, %v1707
  %v1743 = vmul.f32 %v1742, %v1741
  %v1744 = vmul.f32 0.5, %v1743
  %v1745 = vsub.f32 1.5, %v1744
  %v1746 = vmul.f32 %v1741, %v1745
  %vm1747 = vweird.f32 %v1707
  %vm1748 = vweird.f32 %v1741
  %vm1749 = vmor %vm1747, %vm1748
  %v1750 = vsel %vm1749, %v1741, %v1746
  %v1751 = vrsqrt.pop %v1708
  %v1752 = vmul.f32 %v1751, %v1708
  %v1753 = vmul.f32 %v1752, %v1751
  %v1754 = vmul.f32 0.5, %v1753
  %v1755 = vsub.f32 1.5, %v1754
  %v1756 = vmul.f32 %v1751, %v1755
  %vm1757 = vweird.f32 %v1708
  %vm1758 = vweird.f32 %v1751
  %vm1759 = vmor %vm1757, %vm1758
  %v1760 = vsel %vm1759, %v1751, %v1756
  %v1761 = vrsqrt.pop %v1709
  %v1762 = vmul.f32 %v1761, %v1709
  %v1763 = vmul.f32 %v1762, %v1761
  %v1764 = vmul.f32 0.5, %v1763
  %v1765 = vsub.f32 1.5, %v1764
  %v1766 = vmul.f32 %v1761, %v1765
  %vm1767 = vweird.f32 %v1709
  %vm1768 = vweird.f32 %v1761
  %vm1769 = vmor %vm1767, %vm1768
  %v1770 = vsel %vm1769, %v1761, %v1766
  %v1771 = vrsqrt.pop %v1710
  %v1772 = vmul.f32 %v1771, %v1710
  %v1773 = vmul.f32 %v1772, %v1771
  %v1774 = vmul.f32 0.5, %v1773
  %v1775 = vsub.f32 1.5, %v1774
  %v1776 = vmul.f32 %v1771, %v1775
  %vm1777 = vweird.f32 %v1710
  %vm1778 = vweird.f32 %v1771
  %vm1779 = vmor %vm1777, %vm1778
  %v1780 = vsel %vm1779, %v1771, %v1776
  %v1781 = vrsqrt.pop %v1711
  %v1782 = vmul.f32 %v1781, %v1711
  %v1783 = vmul.f32 %v1782, %v1781
  %v1784 = vmul.f32 0.5, %v1783
  %v1785 = vsub.f32 1.5, %v1784
  %v1786 = vmul.f32 %v1781, %v1785
  %vm1787 = vweird.f32 %v1711
  %vm1788 = vweird.f32 %v1781
  %vm1789 = vmor %vm1787, %vm1788
  %v1790 = vsel %vm1789, %v1781, %v1786
  %v1791 = vrsqrt.pop %v1712
  %v1792 = vmul.f32 %v1791, %v1712
  %v1793 = vmul.f32 %v1792, %v1791
  %v1794 = vmul.f32 0.5, %v1793
  %v1795 = vsub.f32 1.5, %v1794
  %v1796 = vmul.f32 %v1791, %v1795
  %vm1797 = vweird.f32 %v1712
  %vm1798 = vweird.f32 %v1791
  %vm1799 = vmor %vm1797, %vm1798
  %v1800 = vsel %vm1799, %v1791, %v1796
  %v1801 = vrsqrt.pop %v1713
  %v1802 = vmul.f32 %v1801, %v1713
  %v1803 = vmul.f32 %v1802, %v1801
  %v1804 = vmul.f32 0.5, %v1803
  %v1805 = vsub.f32 1.5, %v1804
  %v1806 = vmul.f32 %v1801, %v1805
  %vm1807 = vweird.f32 %v1713
  %vm1808 = vweird.f32 %v1801
  %vm1809 = vmor %vm1807, %vm1808
  %v1810 = vsel %vm1809, %v1801, %v1806
  %v1811 = vrsqrt.pop %v1714
  %v1812 = vmul.f32 %v1811, %v1714
  %v1813 = vmul.f32 %v1812, %v1811
  %v1814 = vmul.f32 0.5, %v1813
  %v1815 = vsub.f32 1.5, %v1814
  %v1816 = vmul.f32 %v1811, %v1815
  %vm1817 = vweird.f32 %v1714
  %vm1818 = vweird.f32 %v1811
  %vm1819 = vmor %vm1817, %vm1818
  %v1820 = vsel %vm1819, %v1811, %v1816
  %v1821 = vrsqrt.pop %v1715
  %v1822 = vmul.f32 %v1821, %v1715
  %v1823 = vmul.f32 %v1822, %v1821
  %v1824 = vmul.f32 0.5, %v1823
  %v1825 = vsub.f32 1.5, %v1824
  %v1826 = vmul.f32 %v1821, %v1825
  %vm1827 = vweird.f32 %v1715
  %vm1828 = vweird.f32 %v1821
  %vm1829 = vmor %vm1827, %vm1828
  %v1830 = vsel %vm1829, %v1821, %v1826
  %v1831 = vrsqrt.pop %v1716
  %v1832 = vmul.f32 %v1831, %v1716
  %v1833 = vmul.f32 %v1832, %v1831
  %v1834 = vmul.f32 0.5, %v1833
  %v1835 = vsub.f32 1.5, %v1834
  %v1836 = vmul.f32 %v1831, %v1835
  %vm1837 = vweird.f32 %v1716
  %vm1838 = vweird.f32 %v1831
  %vm1839 = vmor %vm1837, %vm1838
  %v1840 = vsel %vm1839, %v1831, %v1836
  %v1841 = vrsqrt.pop %v1717
  %v1842 = vmul.f32 %v1841, %v1717
  %v1843 = vmul.f32 %v1842, %v1841
  %v1844 = vmul.f32 0.5, %v1843
  %v1845 = vsub.f32 1.5, %v1844
  %v1846 = vmul.f32 %v1841, %v1845
  %vm1847 = vweird.f32 %v1717
  %vm1848 = vweird.f32 %v1841
  %vm1849 = vmor %vm1847, %vm1848
  %v1850 = vsel %vm1849, %v1841, %v1846
  %v1851 = vrsqrt.pop %v1718
  %v1852 = vmul.f32 %v1851, %v1718
  %v1853 = vmul.f32 %v1852, %v1851
  %v1854 = vmul.f32 0.5, %v1853
  %v1855 = vsub.f32 1.5, %v1854
  %v1856 = vmul.f32 %v1851, %v1855
  %vm1857 = vweird.f32 %v1718
  %vm1858 = vweird.f32 %v1851
  %vm1859 = vmor %vm1857, %vm1858
  %v1860 = vsel %vm1859, %v1851, %v1856
  %v1861 = vrsqrt.pop %v1719
  %v1862 = vmul.f32 %v1861, %v1719
  %v1863 = vmul.f32 %v1862, %v1861
  %v1864 = vmul.f32 0.5, %v1863
  %v1865 = vsub.f32 1.5, %v1864
  %v1866 = vmul.f32 %v1861, %v1865
  %vm1867 = vweird.f32 %v1719
  %vm1868 = vweird.f32 %v1861
  %vm1869 = vmor %vm1867, %vm1868
  %v1870 = vsel %vm1869, %v1861, %v1866
  %v1871 = vrsqrt.pop %v1720
  %v1872 = vmul.f32 %v1871, %v1720
  %v1873 = vmul.f32 %v1872, %v1871
  %v1874 = vmul.f32 0.5, %v1873
  %v1875 = vsub.f32 1.5, %v1874
  %v1876 = vmul.f32 %v1871, %v1875
  %vm1877 = vweird.f32 %v1720
  %vm1878 = vweird.f32 %v1871
  %vm1879 = vmor %vm1877, %vm1878
  %v1880 = vsel %vm1879, %v1871, %v1876
  %v1881 = vmul.f32 %v1609, %v1730
  %v1882 = vmul.f32 %v1610, %v1740
  %v1883 = vmul.f32 %v1611, %v1750
  %v1884 = vmul.f32 %v1612, %v1760
  %v1885 = vmul.f32 %v1613, %v1770
  %v1886 = vmul.f32 %v1614, %v1780
  %v1887 = vmul.f32 %v1615, %v1790
  %v1888 = vmul.f32 %v1616, %v1800
  %v1889 = vmul.f32 %v1617, %v1810
  %v1890 = vmul.f32 %v1618, %v1820
  %v1891 = vmul.f32 %v1619, %v1830
  %v1892 = vmul.f32 %v1620, %v1840
  %v1893 = vmul.f32 %v1621, %v1850
  %v1894 = vmul.f32 %v1622, %v1860
  %v1895 = vmul.f32 %v1623, %v1870
  %v1896 = vmul.f32 %v1624, %v1880
  %v1897 = vperm.slane %v1446, 0
  %v1898 = vmul.f32 %v1881, %v1897
  %v1899 = vmul.f32 %v1882, %v1897
  %v1900 = vmul.f32 %v1883, %v1897
  %v1901 = vmul.f32 %v1884, %v1897
  %v1902 = vmul.f32 %v1885, %v1897
  %v1903 = vmul.f32 %v1886, %v1897
  %v1904 = vmul.f32 %v1887, %v1897
  %v1905 = vmul.f32 %v1888, %v1897
  %v1906 = vmul.f32 %v1889, %v1897
  %v1907 = vmul.f32 %v1890, %v1897
  %v1908 = vmul.f32 %v1891, %v1897
  %v1909 = vmul.f32 %v1892, %v1897
  %v1910 = vmul.f32 %v1893, %v1897
  %v1911 = vmul.f32 %v1894, %v1897
  %v1912 = vmul.f32 %v1895, %v1897
  %v1913 = vmul.f32 %v1896, %v1897
  %v1914 = vperm.slane %v1446, 1
  %v1915 = vadd.f32 %v1898, %v1914
  %v1916 = vadd.f32 %v1899, %v1914
  %v1917 = vadd.f32 %v1900, %v1914
  %v1918 = vadd.f32 %v1901, %v1914
  %v1919 = vadd.f32 %v1902, %v1914
  %v1920 = vadd.f32 %v1903, %v1914
  %v1921 = vadd.f32 %v1904, %v1914
  %v1922 = vadd.f32 %v1905, %v1914
  %v1923 = vadd.f32 %v1906, %v1914
  %v1924 = vadd.f32 %v1907, %v1914
  %v1925 = vadd.f32 %v1908, %v1914
  %v1926 = vadd.f32 %v1909, %v1914
  %v1927 = vadd.f32 %v1910, %v1914
  %v1928 = vadd.f32 %v1911, %v1914
  %v1929 = vadd.f32 %v1912, %v1914
  %v1930 = vadd.f32 %v1913, %v1914
  %v1931 = vpack.c.bf16 %v1916, %v1915
  %v1932 = vpack.c.bf16 %v1918, %v1917
  %v1933 = vpack.c.bf16 %v1920, %v1919
  %v1934 = vpack.c.bf16 %v1922, %v1921
  %v1935 = vpack.c.bf16 %v1924, %v1923
  %v1936 = vpack.c.bf16 %v1926, %v1925
  %v1937 = vpack.c.bf16 %v1928, %v1927
  %v1938 = vpack.c.bf16 %v1930, %v1929
  %v1939 = vperm.slane %v1446, 4
  %v1944 = vunpack.c.l.b16 %v1458
  %v1945 = vunpack.c.l.b16 %v1459
  %v1946 = vunpack.c.l.b16 %v1460
  %v1947 = vunpack.c.l.b16 %v1461
  %v1948 = vpack.c.b16 %v1945, %v1944
  %v1949 = vpack.c.b16 %v1947, %v1946
  %v1953 = vsel %vm75, %v1931, 0
  %v1956 = vsel %vm75, %v1932, 0
  %v1959 = vsel %vm75, %v1933, 0
  %v1962 = vsel %vm75, %v1934, 0
  %v1965 = vsel %vm75, %v1935, 0
  %v1968 = vsel %vm75, %v1936, 0
  %v1971 = vsel %vm75, %v1937, 0
  %v1974 = vsel %vm75, %v1938, 0
  %1976 = vmatpush.bf16.msra.mxu0 0
  %1977 = vmatpush.bf16.msra.mxu0 0
  %1978 = vmatpush.bf16.msra.mxu0 0
  %1979 = vmatpush.bf16.msra.mxu0 0
  %1980 = vmatpush.bf16.msra.mxu0 0
  %1981 = vmatpush.bf16.msra.mxu0 0
  %1982 = vmatpush.bf16.msra.mxu0 %v1949
  %1983 = vmatpush.bf16.msra.mxu0 %v1948
  %1984 = vmatmul.bf16.gmra.mxu0 %v1953
  %v1985 = vpop.f32.mrf.mxu0
  %v1986 = vadd.f32 %v1939, %v1985
  %v1987 = vpop.f32.mrf.mxu0
  %v1988 = vadd.f32 %v1939, %v1987
  %1989 = vmatmul.bf16.gmra.mxu0 %v1956
  %v1990 = vpop.f32.mrf.mxu0
  %v1991 = vadd.f32 %v1939, %v1990
  %v1992 = vpop.f32.mrf.mxu0
  %v1993 = vadd.f32 %v1939, %v1992
  %1994 = vmatmul.bf16.gmra.mxu0 %v1959
  %v1995 = vpop.f32.mrf.mxu0
  %v1996 = vadd.f32 %v1939, %v1995
  %v1997 = vpop.f32.mrf.mxu0
  %v1998 = vadd.f32 %v1939, %v1997
  %1999 = vmatmul.bf16.gmra.mxu0 %v1962
  %v2000 = vpop.f32.mrf.mxu0
  %v2001 = vadd.f32 %v1939, %v2000
  %v2002 = vpop.f32.mrf.mxu0
  %v2003 = vadd.f32 %v1939, %v2002
  %2004 = vmatmul.bf16.gmra.mxu0 %v1965
  %v2005 = vpop.f32.mrf.mxu0
  %v2006 = vadd.f32 %v1939, %v2005
  %v2007 = vpop.f32.mrf.mxu0
  %v2008 = vadd.f32 %v1939, %v2007
  %2009 = vmatmul.bf16.gmra.mxu0 %v1968
  %v2010 = vpop.f32.mrf.mxu0
  %v2011 = vadd.f32 %v1939, %v2010
  %v2012 = vpop.f32.mrf.mxu0
  %v2013 = vadd.f32 %v1939, %v2012
  %2014 = vmatmul.bf16.gmra.mxu0 %v1971
  %v2015 = vpop.f32.mrf.mxu0
  %v2016 = vadd.f32 %v1939, %v2015
  %v2017 = vpop.f32.mrf.mxu0
  %v2018 = vadd.f32 %v1939, %v2017
  %2019 = vmatmul.bf16.gmra.mxu0 %v1974
  %v2020 = vpop.f32.mrf.mxu0
  %v2021 = vadd.f32 %v1939, %v2020
  %v2022 = vpop.f32.mrf.mxu0
  %v2023 = vadd.f32 %v1939, %v2022
  %2024 = vdwg.mxu0
  %v2025 = vmul.f32 %v1986, 0.5
  %v2026 = vmul.f32 %v1988, 0.5
  %v2027 = vmul.f32 %v1991, 0.5
  %v2028 = vmul.f32 %v1993, 0.5
  %v2029 = vmul.f32 %v1996, 0.5
  %v2030 = vmul.f32 %v1998, 0.5
  %v2031 = vmul.f32 %v2001, 0.5
  %v2032 = vmul.f32 %v2003, 0.5
  %v2033 = vmul.f32 %v2006, 0.5
  %v2034 = vmul.f32 %v2008, 0.5
  %v2035 = vmul.f32 %v2011, 0.5
  %v2036 = vmul.f32 %v2013, 0.5
  %v2037 = vmul.f32 %v2016, 0.5
  %v2038 = vmul.f32 %v2018, 0.5
  %v2039 = vmul.f32 %v2021, 0.5
  %v2040 = vmul.f32 %v2023, 0.5
  %v2041 = vmul.f32 %v1986, 0.70710677
  %v2042 = vmul.f32 %v1988, 0.70710677
  %v2043 = vmul.f32 %v1991, 0.70710677
  %v2044 = vmul.f32 %v1993, 0.70710677
  %v2045 = vmul.f32 %v1996, 0.70710677
  %v2046 = vmul.f32 %v1998, 0.70710677
  %v2047 = vmul.f32 %v2001, 0.70710677
  %v2048 = vmul.f32 %v2003, 0.70710677
  %v2049 = vmul.f32 %v2006, 0.70710677
  %v2050 = vmul.f32 %v2008, 0.70710677
  %v2051 = vmul.f32 %v2011, 0.70710677
  %v2052 = vmul.f32 %v2013, 0.70710677
  %v2053 = vmul.f32 %v2016, 0.70710677
  %v2054 = vmul.f32 %v2018, 0.70710677
  %v2055 = vmul.f32 %v2021, 0.70710677
  %v2056 = vmul.f32 %v2023, 0.70710677
  %v2057 = vmul.f32 %v2041, %v2041
  %v2058 = vmin.f32 16.0, %v2057
  %v2059 = vmul.f32 %v2058, 2.1237322e-06
  %v2060 = vadd.f32 %v2059, 0.00028619796
  %v2061 = vmul.f32 %v2058, %v2060
  %v2062 = vadd.f32 %v2061, 0.0036580483
  %v2063 = vmul.f32 %v2058, %v2062
  %v2064 = vadd.f32 %v2063, 0.05243302
  %v2065 = vmul.f32 %v2058, %v2064
  %v2066 = vadd.f32 %v2065, 0.18741608
  %v2067 = vmul.f32 %v2058, %v2066
  %v2068 = vadd.f32 %v2067, 1.1283791
  %v2069 = vmul.f32 %v2041, %v2068
  %v2070 = vmul.f32 %v2058, 3.8918573e-05
  %v2071 = vadd.f32 %v2070, 0.001143296
  %v2072 = vmul.f32 %v2058, %v2071
  %v2073 = vadd.f32 %v2072, 0.014752088
  %v2074 = vmul.f32 %v2058, %v2073
  %v2075 = vadd.f32 %v2074, 0.112945676
  %v2076 = vmul.f32 %v2058, %v2075
  %v2077 = vadd.f32 %v2076, 0.4994258
  %v2078 = vmul.f32 %v2058, %v2077
  %v2079 = vadd.f32 %v2078, 1.0
  %v2080 = vrcp.pop %v2079
  %v2081 = vmul.f32 %v2079, %v2080
  %v2082 = vsub.f32 1.0, %v2081
  %v2083 = vmul.f32 %v2080, %v2082
  %v2084 = vadd.f32 %v2080, %v2083
  %vm2085 = vweird.f32 %v2079
  %vm2086 = vweird.f32 %v2080
  %vm2087 = vmor %vm2085, %vm2086
  %v2088 = vsel %vm2087, %v2080, %v2084
  %v2089 = vand.u32 2147483647, %v2079
  %vm2090 = vcmp.eq.f32.partialorder %v2089, 8.507059e+37
  %v2091 = vand.u32 %v2079, 2147483648
  %v2092 = vor.u32 1.1754944e-38, %v2091
  %v2093 = vsel %vm2090, %v2092, %v2088
  %v2094 = vmul.f32 %v2069, %v2093
  %v2095 = vmin.f32 %v2094, 1.0
  %v2096 = vmax.f32 %v2095, -1.0
  %v2097 = vmul.f32 %v2042, %v2042
  %v2098 = vmin.f32 16.0, %v2097
  %v2099 = vmul.f32 %v2098, 2.1237322e-06
  %v2100 = vadd.f32 %v2099, 0.00028619796
  %v2101 = vmul.f32 %v2098, %v2100
  %v2102 = vadd.f32 %v2101, 0.0036580483
  %v2103 = vmul.f32 %v2098, %v2102
  %v2104 = vadd.f32 %v2103, 0.05243302
  %v2105 = vmul.f32 %v2098, %v2104
  %v2106 = vadd.f32 %v2105, 0.18741608
  %v2107 = vmul.f32 %v2098, %v2106
  %v2108 = vadd.f32 %v2107, 1.1283791
  %v2109 = vmul.f32 %v2042, %v2108
  %v2110 = vmul.f32 %v2098, 3.8918573e-05
  %v2111 = vadd.f32 %v2110, 0.001143296
  %v2112 = vmul.f32 %v2098, %v2111
  %v2113 = vadd.f32 %v2112, 0.014752088
  %v2114 = vmul.f32 %v2098, %v2113
  %v2115 = vadd.f32 %v2114, 0.112945676
  %v2116 = vmul.f32 %v2098, %v2115
  %v2117 = vadd.f32 %v2116, 0.4994258
  %v2118 = vmul.f32 %v2098, %v2117
  %v2119 = vadd.f32 %v2118, 1.0
  %v2120 = vrcp.pop %v2119
  %v2121 = vmul.f32 %v2119, %v2120
  %v2122 = vsub.f32 1.0, %v2121
  %v2123 = vmul.f32 %v2120, %v2122
  %v2124 = vadd.f32 %v2120, %v2123
  %vm2125 = vweird.f32 %v2119
  %vm2126 = vweird.f32 %v2120
  %vm2127 = vmor %vm2125, %vm2126
  %v2128 = vsel %vm2127, %v2120, %v2124
  %v2129 = vand.u32 2147483647, %v2119
  %vm2130 = vcmp.eq.f32.partialorder %v2129, 8.507059e+37
  %v2131 = vand.u32 %v2119, 2147483648
  %v2132 = vor.u32 1.1754944e-38, %v2131
  %v2133 = vsel %vm2130, %v2132, %v2128
  %v2134 = vmul.f32 %v2109, %v2133
  %v2135 = vmin.f32 %v2134, 1.0
  %v2136 = vmax.f32 %v2135, -1.0
  %v2137 = vmul.f32 %v2043, %v2043
  %v2138 = vmin.f32 16.0, %v2137
  %v2139 = vmul.f32 %v2138, 2.1237322e-06
  %v2140 = vadd.f32 %v2139, 0.00028619796
  %v2141 = vmul.f32 %v2138, %v2140
  %v2142 = vadd.f32 %v2141, 0.0036580483
  %v2143 = vmul.f32 %v2138, %v2142
  %v2144 = vadd.f32 %v2143, 0.05243302
  %v2145 = vmul.f32 %v2138, %v2144
  %v2146 = vadd.f32 %v2145, 0.18741608
  %v2147 = vmul.f32 %v2138, %v2146
  %v2148 = vadd.f32 %v2147, 1.1283791
  %v2149 = vmul.f32 %v2043, %v2148
  %v2150 = vmul.f32 %v2138, 3.8918573e-05
  %v2151 = vadd.f32 %v2150, 0.001143296
  %v2152 = vmul.f32 %v2138, %v2151
  %v2153 = vadd.f32 %v2152, 0.014752088
  %v2154 = vmul.f32 %v2138, %v2153
  %v2155 = vadd.f32 %v2154, 0.112945676
  %v2156 = vmul.f32 %v2138, %v2155
  %v2157 = vadd.f32 %v2156, 0.4994258
  %v2158 = vmul.f32 %v2138, %v2157
  %v2159 = vadd.f32 %v2158, 1.0
  %v2160 = vrcp.pop %v2159
  %v2161 = vmul.f32 %v2159, %v2160
  %v2162 = vsub.f32 1.0, %v2161
  %v2163 = vmul.f32 %v2160, %v2162
  %v2164 = vadd.f32 %v2160, %v2163
  %vm2165 = vweird.f32 %v2159
  %vm2166 = vweird.f32 %v2160
  %vm2167 = vmor %vm2165, %vm2166
  %v2168 = vsel %vm2167, %v2160, %v2164
  %v2169 = vand.u32 2147483647, %v2159
  %vm2170 = vcmp.eq.f32.partialorder %v2169, 8.507059e+37
  %v2171 = vand.u32 %v2159, 2147483648
  %v2172 = vor.u32 1.1754944e-38, %v2171
  %v2173 = vsel %vm2170, %v2172, %v2168
  %v2174 = vmul.f32 %v2149, %v2173
  %v2175 = vmin.f32 %v2174, 1.0
  %v2176 = vmax.f32 %v2175, -1.0
  %v2177 = vmul.f32 %v2044, %v2044
  %v2178 = vmin.f32 16.0, %v2177
  %v2179 = vmul.f32 %v2178, 2.1237322e-06
  %v2180 = vadd.f32 %v2179, 0.00028619796
  %v2181 = vmul.f32 %v2178, %v2180
  %v2182 = vadd.f32 %v2181, 0.0036580483
  %v2183 = vmul.f32 %v2178, %v2182
  %v2184 = vadd.f32 %v2183, 0.05243302
  %v2185 = vmul.f32 %v2178, %v2184
  %v2186 = vadd.f32 %v2185, 0.18741608
  %v2187 = vmul.f32 %v2178, %v2186
  %v2188 = vadd.f32 %v2187, 1.1283791
  %v2189 = vmul.f32 %v2044, %v2188
  %v2190 = vmul.f32 %v2178, 3.8918573e-05
  %v2191 = vadd.f32 %v2190, 0.001143296
  %v2192 = vmul.f32 %v2178, %v2191
  %v2193 = vadd.f32 %v2192, 0.014752088
  %v2194 = vmul.f32 %v2178, %v2193
  %v2195 = vadd.f32 %v2194, 0.112945676
  %v2196 = vmul.f32 %v2178, %v2195
  %v2197 = vadd.f32 %v2196, 0.4994258
  %v2198 = vmul.f32 %v2178, %v2197
  %v2199 = vadd.f32 %v2198, 1.0
  %v2200 = vrcp.pop %v2199
  %v2201 = vmul.f32 %v2199, %v2200
  %v2202 = vsub.f32 1.0, %v2201
  %v2203 = vmul.f32 %v2200, %v2202
  %v2204 = vadd.f32 %v2200, %v2203
  %vm2205 = vweird.f32 %v2199
  %vm2206 = vweird.f32 %v2200
  %vm2207 = vmor %vm2205, %vm2206
  %v2208 = vsel %vm2207, %v2200, %v2204
  %v2209 = vand.u32 2147483647, %v2199
  %vm2210 = vcmp.eq.f32.partialorder %v2209, 8.507059e+37
  %v2211 = vand.u32 %v2199, 2147483648
  %v2212 = vor.u32 1.1754944e-38, %v2211
  %v2213 = vsel %vm2210, %v2212, %v2208
  %v2214 = vmul.f32 %v2189, %v2213
  %v2215 = vmin.f32 %v2214, 1.0
  %v2216 = vmax.f32 %v2215, -1.0
  %v2217 = vmul.f32 %v2045, %v2045
  %v2218 = vmin.f32 16.0, %v2217
  %v2219 = vmul.f32 %v2218, 2.1237322e-06
  %v2220 = vadd.f32 %v2219, 0.00028619796
  %v2221 = vmul.f32 %v2218, %v2220
  %v2222 = vadd.f32 %v2221, 0.0036580483
  %v2223 = vmul.f32 %v2218, %v2222
  %v2224 = vadd.f32 %v2223, 0.05243302
  %v2225 = vmul.f32 %v2218, %v2224
  %v2226 = vadd.f32 %v2225, 0.18741608
  %v2227 = vmul.f32 %v2218, %v2226
  %v2228 = vadd.f32 %v2227, 1.1283791
  %v2229 = vmul.f32 %v2045, %v2228
  %v2230 = vmul.f32 %v2218, 3.8918573e-05
  %v2231 = vadd.f32 %v2230, 0.001143296
  %v2232 = vmul.f32 %v2218, %v2231
  %v2233 = vadd.f32 %v2232, 0.014752088
  %v2234 = vmul.f32 %v2218, %v2233
  %v2235 = vadd.f32 %v2234, 0.112945676
  %v2236 = vmul.f32 %v2218, %v2235
  %v2237 = vadd.f32 %v2236, 0.4994258
  %v2238 = vmul.f32 %v2218, %v2237
  %v2239 = vadd.f32 %v2238, 1.0
  %v2240 = vrcp.pop %v2239
  %v2241 = vmul.f32 %v2239, %v2240
  %v2242 = vsub.f32 1.0, %v2241
  %v2243 = vmul.f32 %v2240, %v2242
  %v2244 = vadd.f32 %v2240, %v2243
  %vm2245 = vweird.f32 %v2239
  %vm2246 = vweird.f32 %v2240
  %vm2247 = vmor %vm2245, %vm2246
  %v2248 = vsel %vm2247, %v2240, %v2244
  %v2249 = vand.u32 2147483647, %v2239
  %vm2250 = vcmp.eq.f32.partialorder %v2249, 8.507059e+37
  %v2251 = vand.u32 %v2239, 2147483648
  %v2252 = vor.u32 1.1754944e-38, %v2251
  %v2253 = vsel %vm2250, %v2252, %v2248
  %v2254 = vmul.f32 %v2229, %v2253
  %v2255 = vmin.f32 %v2254, 1.0
  %v2256 = vmax.f32 %v2255, -1.0
  %v2257 = vmul.f32 %v2046, %v2046
  %v2258 = vmin.f32 16.0, %v2257
  %v2259 = vmul.f32 %v2258, 2.1237322e-06
  %v2260 = vadd.f32 %v2259, 0.00028619796
  %v2261 = vmul.f32 %v2258, %v2260
  %v2262 = vadd.f32 %v2261, 0.0036580483
  %v2263 = vmul.f32 %v2258, %v2262
  %v2264 = vadd.f32 %v2263, 0.05243302
  %v2265 = vmul.f32 %v2258, %v2264
  %v2266 = vadd.f32 %v2265, 0.18741608
  %v2267 = vmul.f32 %v2258, %v2266
  %v2268 = vadd.f32 %v2267, 1.1283791
  %v2269 = vmul.f32 %v2046, %v2268
  %v2270 = vmul.f32 %v2258, 3.8918573e-05
  %v2271 = vadd.f32 %v2270, 0.001143296
  %v2272 = vmul.f32 %v2258, %v2271
  %v2273 = vadd.f32 %v2272, 0.014752088
  %v2274 = vmul.f32 %v2258, %v2273
  %v2275 = vadd.f32 %v2274, 0.112945676
  %v2276 = vmul.f32 %v2258, %v2275
  %v2277 = vadd.f32 %v2276, 0.4994258
  %v2278 = vmul.f32 %v2258, %v2277
  %v2279 = vadd.f32 %v2278, 1.0
  %v2280 = vrcp.pop %v2279
  %v2281 = vmul.f32 %v2279, %v2280
  %v2282 = vsub.f32 1.0, %v2281
  %v2283 = vmul.f32 %v2280, %v2282
  %v2284 = vadd.f32 %v2280, %v2283
  %vm2285 = vweird.f32 %v2279
  %vm2286 = vweird.f32 %v2280
  %vm2287 = vmor %vm2285, %vm2286
  %v2288 = vsel %vm2287, %v2280, %v2284
  %v2289 = vand.u32 2147483647, %v2279
  %vm2290 = vcmp.eq.f32.partialorder %v2289, 8.507059e+37
  %v2291 = vand.u32 %v2279, 2147483648
  %v2292 = vor.u32 1.1754944e-38, %v2291
  %v2293 = vsel %vm2290, %v2292, %v2288
  %v2294 = vmul.f32 %v2269, %v2293
  %v2295 = vmin.f32 %v2294, 1.0
  %v2296 = vmax.f32 %v2295, -1.0
  %v2297 = vmul.f32 %v2047, %v2047
  %v2298 = vmin.f32 16.0, %v2297
  %v2299 = vmul.f32 %v2298, 2.1237322e-06
  %v2300 = vadd.f32 %v2299, 0.00028619796
  %v2301 = vmul.f32 %v2298, %v2300
  %v2302 = vadd.f32 %v2301, 0.0036580483
  %v2303 = vmul.f32 %v2298, %v2302
  %v2304 = vadd.f32 %v2303, 0.05243302
  %v2305 = vmul.f32 %v2298, %v2304
  %v2306 = vadd.f32 %v2305, 0.18741608
  %v2307 = vmul.f32 %v2298, %v2306
  %v2308 = vadd.f32 %v2307, 1.1283791
  %v2309 = vmul.f32 %v2047, %v2308
  %v2310 = vmul.f32 %v2298, 3.8918573e-05
  %v2311 = vadd.f32 %v2310, 0.001143296
  %v2312 = vmul.f32 %v2298, %v2311
  %v2313 = vadd.f32 %v2312, 0.014752088
  %v2314 = vmul.f32 %v2298, %v2313
  %v2315 = vadd.f32 %v2314, 0.112945676
  %v2316 = vmul.f32 %v2298, %v2315
  %v2317 = vadd.f32 %v2316, 0.4994258
  %v2318 = vmul.f32 %v2298, %v2317
  %v2319 = vadd.f32 %v2318, 1.0
  %v2320 = vrcp.pop %v2319
  %v2321 = vmul.f32 %v2319, %v2320
  %v2322 = vsub.f32 1.0, %v2321
  %v2323 = vmul.f32 %v2320, %v2322
  %v2324 = vadd.f32 %v2320, %v2323
  %vm2325 = vweird.f32 %v2319
  %vm2326 = vweird.f32 %v2320
  %vm2327 = vmor %vm2325, %vm2326
  %v2328 = vsel %vm2327, %v2320, %v2324
  %v2329 = vand.u32 2147483647, %v2319
  %vm2330 = vcmp.eq.f32.partialorder %v2329, 8.507059e+37
  %v2331 = vand.u32 %v2319, 2147483648
  %v2332 = vor.u32 1.1754944e-38, %v2331
  %v2333 = vsel %vm2330, %v2332, %v2328
  %v2334 = vmul.f32 %v2309, %v2333
  %v2335 = vmin.f32 %v2334, 1.0
  %v2336 = vmax.f32 %v2335, -1.0
  %v2337 = vmul.f32 %v2048, %v2048
  %v2338 = vmin.f32 16.0, %v2337
  %v2339 = vmul.f32 %v2338, 2.1237322e-06
  %v2340 = vadd.f32 %v2339, 0.00028619796
  %v2341 = vmul.f32 %v2338, %v2340
  %v2342 = vadd.f32 %v2341, 0.0036580483
  %v2343 = vmul.f32 %v2338, %v2342
  %v2344 = vadd.f32 %v2343, 0.05243302
  %v2345 = vmul.f32 %v2338, %v2344
  %v2346 = vadd.f32 %v2345, 0.18741608
  %v2347 = vmul.f32 %v2338, %v2346
  %v2348 = vadd.f32 %v2347, 1.1283791
  %v2349 = vmul.f32 %v2048, %v2348
  %v2350 = vmul.f32 %v2338, 3.8918573e-05
  %v2351 = vadd.f32 %v2350, 0.001143296
  %v2352 = vmul.f32 %v2338, %v2351
  %v2353 = vadd.f32 %v2352, 0.014752088
  %v2354 = vmul.f32 %v2338, %v2353
  %v2355 = vadd.f32 %v2354, 0.112945676
  %v2356 = vmul.f32 %v2338, %v2355
  %v2357 = vadd.f32 %v2356, 0.4994258
  %v2358 = vmul.f32 %v2338, %v2357
  %v2359 = vadd.f32 %v2358, 1.0
  %v2360 = vrcp.pop %v2359
  %v2361 = vmul.f32 %v2359, %v2360
  %v2362 = vsub.f32 1.0, %v2361
  %v2363 = vmul.f32 %v2360, %v2362
  %v2364 = vadd.f32 %v2360, %v2363
  %vm2365 = vweird.f32 %v2359
  %vm2366 = vweird.f32 %v2360
  %vm2367 = vmor %vm2365, %vm2366
  %v2368 = vsel %vm2367, %v2360, %v2364
  %v2369 = vand.u32 2147483647, %v2359
  %vm2370 = vcmp.eq.f32.partialorder %v2369, 8.507059e+37
  %v2371 = vand.u32 %v2359, 2147483648
  %v2372 = vor.u32 1.1754944e-38, %v2371
  %v2373 = vsel %vm2370, %v2372, %v2368
  %v2374 = vmul.f32 %v2349, %v2373
  %v2375 = vmin.f32 %v2374, 1.0
  %v2376 = vmax.f32 %v2375, -1.0
  %v2377 = vmul.f32 %v2049, %v2049
  %v2378 = vmin.f32 16.0, %v2377
  %v2379 = vmul.f32 %v2378, 2.1237322e-06
  %v2380 = vadd.f32 %v2379, 0.00028619796
  %v2381 = vmul.f32 %v2378, %v2380
  %v2382 = vadd.f32 %v2381, 0.0036580483
  %v2383 = vmul.f32 %v2378, %v2382
  %v2384 = vadd.f32 %v2383, 0.05243302
  %v2385 = vmul.f32 %v2378, %v2384
  %v2386 = vadd.f32 %v2385, 0.18741608
  %v2387 = vmul.f32 %v2378, %v2386
  %v2388 = vadd.f32 %v2387, 1.1283791
  %v2389 = vmul.f32 %v2049, %v2388
  %v2390 = vmul.f32 %v2378, 3.8918573e-05
  %v2391 = vadd.f32 %v2390, 0.001143296
  %v2392 = vmul.f32 %v2378, %v2391
  %v2393 = vadd.f32 %v2392, 0.014752088
  %v2394 = vmul.f32 %v2378, %v2393
  %v2395 = vadd.f32 %v2394, 0.112945676
  %v2396 = vmul.f32 %v2378, %v2395
  %v2397 = vadd.f32 %v2396, 0.4994258
  %v2398 = vmul.f32 %v2378, %v2397
  %v2399 = vadd.f32 %v2398, 1.0
  %v2400 = vrcp.pop %v2399
  %v2401 = vmul.f32 %v2399, %v2400
  %v2402 = vsub.f32 1.0, %v2401
  %v2403 = vmul.f32 %v2400, %v2402
  %v2404 = vadd.f32 %v2400, %v2403
  %vm2405 = vweird.f32 %v2399
  %vm2406 = vweird.f32 %v2400
  %vm2407 = vmor %vm2405, %vm2406
  %v2408 = vsel %vm2407, %v2400, %v2404
  %v2409 = vand.u32 2147483647, %v2399
  %vm2410 = vcmp.eq.f32.partialorder %v2409, 8.507059e+37
  %v2411 = vand.u32 %v2399, 2147483648
  %v2412 = vor.u32 1.1754944e-38, %v2411
  %v2413 = vsel %vm2410, %v2412, %v2408
  %v2414 = vmul.f32 %v2389, %v2413
  %v2415 = vmin.f32 %v2414, 1.0
  %v2416 = vmax.f32 %v2415, -1.0
  %v2417 = vmul.f32 %v2050, %v2050
  %v2418 = vmin.f32 16.0, %v2417
  %v2419 = vmul.f32 %v2418, 2.1237322e-06
  %v2420 = vadd.f32 %v2419, 0.00028619796
  %v2421 = vmul.f32 %v2418, %v2420
  %v2422 = vadd.f32 %v2421, 0.0036580483
  %v2423 = vmul.f32 %v2418, %v2422
  %v2424 = vadd.f32 %v2423, 0.05243302
  %v2425 = vmul.f32 %v2418, %v2424
  %v2426 = vadd.f32 %v2425, 0.18741608
  %v2427 = vmul.f32 %v2418, %v2426
  %v2428 = vadd.f32 %v2427, 1.1283791
  %v2429 = vmul.f32 %v2050, %v2428
  %v2430 = vmul.f32 %v2418, 3.8918573e-05
  %v2431 = vadd.f32 %v2430, 0.001143296
  %v2432 = vmul.f32 %v2418, %v2431
  %v2433 = vadd.f32 %v2432, 0.014752088
  %v2434 = vmul.f32 %v2418, %v2433
  %v2435 = vadd.f32 %v2434, 0.112945676
  %v2436 = vmul.f32 %v2418, %v2435
  %v2437 = vadd.f32 %v2436, 0.4994258
  %v2438 = vmul.f32 %v2418, %v2437
  %v2439 = vadd.f32 %v2438, 1.0
  %v2440 = vrcp.pop %v2439
  %v2441 = vmul.f32 %v2439, %v2440
  %v2442 = vsub.f32 1.0, %v2441
  %v2443 = vmul.f32 %v2440, %v2442
  %v2444 = vadd.f32 %v2440, %v2443
  %vm2445 = vweird.f32 %v2439
  %vm2446 = vweird.f32 %v2440
  %vm2447 = vmor %vm2445, %vm2446
  %v2448 = vsel %vm2447, %v2440, %v2444
  %v2449 = vand.u32 2147483647, %v2439
  %vm2450 = vcmp.eq.f32.partialorder %v2449, 8.507059e+37
  %v2451 = vand.u32 %v2439, 2147483648
  %v2452 = vor.u32 1.1754944e-38, %v2451
  %v2453 = vsel %vm2450, %v2452, %v2448
  %v2454 = vmul.f32 %v2429, %v2453
  %v2455 = vmin.f32 %v2454, 1.0
  %v2456 = vmax.f32 %v2455, -1.0
  %v2457 = vmul.f32 %v2051, %v2051
  %v2458 = vmin.f32 16.0, %v2457
  %v2459 = vmul.f32 %v2458, 2.1237322e-06
  %v2460 = vadd.f32 %v2459, 0.00028619796
  %v2461 = vmul.f32 %v2458, %v2460
  %v2462 = vadd.f32 %v2461, 0.0036580483
  %v2463 = vmul.f32 %v2458, %v2462
  %v2464 = vadd.f32 %v2463, 0.05243302
  %v2465 = vmul.f32 %v2458, %v2464
  %v2466 = vadd.f32 %v2465, 0.18741608
  %v2467 = vmul.f32 %v2458, %v2466
  %v2468 = vadd.f32 %v2467, 1.1283791
  %v2469 = vmul.f32 %v2051, %v2468
  %v2470 = vmul.f32 %v2458, 3.8918573e-05
  %v2471 = vadd.f32 %v2470, 0.001143296
  %v2472 = vmul.f32 %v2458, %v2471
  %v2473 = vadd.f32 %v2472, 0.014752088
  %v2474 = vmul.f32 %v2458, %v2473
  %v2475 = vadd.f32 %v2474, 0.112945676
  %v2476 = vmul.f32 %v2458, %v2475
  %v2477 = vadd.f32 %v2476, 0.4994258
  %v2478 = vmul.f32 %v2458, %v2477
  %v2479 = vadd.f32 %v2478, 1.0
  %v2480 = vrcp.pop %v2479
  %v2481 = vmul.f32 %v2479, %v2480
  %v2482 = vsub.f32 1.0, %v2481
  %v2483 = vmul.f32 %v2480, %v2482
  %v2484 = vadd.f32 %v2480, %v2483
  %vm2485 = vweird.f32 %v2479
  %vm2486 = vweird.f32 %v2480
  %vm2487 = vmor %vm2485, %vm2486
  %v2488 = vsel %vm2487, %v2480, %v2484
  %v2489 = vand.u32 2147483647, %v2479
  %vm2490 = vcmp.eq.f32.partialorder %v2489, 8.507059e+37
  %v2491 = vand.u32 %v2479, 2147483648
  %v2492 = vor.u32 1.1754944e-38, %v2491
  %v2493 = vsel %vm2490, %v2492, %v2488
  %v2494 = vmul.f32 %v2469, %v2493
  %v2495 = vmin.f32 %v2494, 1.0
  %v2496 = vmax.f32 %v2495, -1.0
  %v2497 = vmul.f32 %v2052, %v2052
  %v2498 = vmin.f32 16.0, %v2497
  %v2499 = vmul.f32 %v2498, 2.1237322e-06
  %v2500 = vadd.f32 %v2499, 0.00028619796
  %v2501 = vmul.f32 %v2498, %v2500
  %v2502 = vadd.f32 %v2501, 0.0036580483
  %v2503 = vmul.f32 %v2498, %v2502
  %v2504 = vadd.f32 %v2503, 0.05243302
  %v2505 = vmul.f32 %v2498, %v2504
  %v2506 = vadd.f32 %v2505, 0.18741608
  %v2507 = vmul.f32 %v2498, %v2506
  %v2508 = vadd.f32 %v2507, 1.1283791
  %v2509 = vmul.f32 %v2052, %v2508
  %v2510 = vmul.f32 %v2498, 3.8918573e-05
  %v2511 = vadd.f32 %v2510, 0.001143296
  %v2512 = vmul.f32 %v2498, %v2511
  %v2513 = vadd.f32 %v2512, 0.014752088
  %v2514 = vmul.f32 %v2498, %v2513
  %v2515 = vadd.f32 %v2514, 0.112945676
  %v2516 = vmul.f32 %v2498, %v2515
  %v2517 = vadd.f32 %v2516, 0.4994258
  %v2518 = vmul.f32 %v2498, %v2517
  %v2519 = vadd.f32 %v2518, 1.0
  %v2520 = vrcp.pop %v2519
  %v2521 = vmul.f32 %v2519, %v2520
  %v2522 = vsub.f32 1.0, %v2521
  %v2523 = vmul.f32 %v2520, %v2522
  %v2524 = vadd.f32 %v2520, %v2523
  %vm2525 = vweird.f32 %v2519
  %vm2526 = vweird.f32 %v2520
  %vm2527 = vmor %vm2525, %vm2526
  %v2528 = vsel %vm2527, %v2520, %v2524
  %v2529 = vand.u32 2147483647, %v2519
  %vm2530 = vcmp.eq.f32.partialorder %v2529, 8.507059e+37
  %v2531 = vand.u32 %v2519, 2147483648
  %v2532 = vor.u32 1.1754944e-38, %v2531
  %v2533 = vsel %vm2530, %v2532, %v2528
  %v2534 = vmul.f32 %v2509, %v2533
  %v2535 = vmin.f32 %v2534, 1.0
  %v2536 = vmax.f32 %v2535, -1.0
  %v2537 = vmul.f32 %v2053, %v2053
  %v2538 = vmin.f32 16.0, %v2537
  %v2539 = vmul.f32 %v2538, 2.1237322e-06
  %v2540 = vadd.f32 %v2539, 0.00028619796
  %v2541 = vmul.f32 %v2538, %v2540
  %v2542 = vadd.f32 %v2541, 0.0036580483
  %v2543 = vmul.f32 %v2538, %v2542
  %v2544 = vadd.f32 %v2543, 0.05243302
  %v2545 = vmul.f32 %v2538, %v2544
  %v2546 = vadd.f32 %v2545, 0.18741608
  %v2547 = vmul.f32 %v2538, %v2546
  %v2548 = vadd.f32 %v2547, 1.1283791
  %v2549 = vmul.f32 %v2053, %v2548
  %v2550 = vmul.f32 %v2538, 3.8918573e-05
  %v2551 = vadd.f32 %v2550, 0.001143296
  %v2552 = vmul.f32 %v2538, %v2551
  %v2553 = vadd.f32 %v2552, 0.014752088
  %v2554 = vmul.f32 %v2538, %v2553
  %v2555 = vadd.f32 %v2554, 0.112945676
  %v2556 = vmul.f32 %v2538, %v2555
  %v2557 = vadd.f32 %v2556, 0.4994258
  %v2558 = vmul.f32 %v2538, %v2557
  %v2559 = vadd.f32 %v2558, 1.0
  %v2560 = vrcp.pop %v2559
  %v2561 = vmul.f32 %v2559, %v2560
  %v2562 = vsub.f32 1.0, %v2561
  %v2563 = vmul.f32 %v2560, %v2562
  %v2564 = vadd.f32 %v2560, %v2563
  %vm2565 = vweird.f32 %v2559
  %vm2566 = vweird.f32 %v2560
  %vm2567 = vmor %vm2565, %vm2566
  %v2568 = vsel %vm2567, %v2560, %v2564
  %v2569 = vand.u32 2147483647, %v2559
  %vm2570 = vcmp.eq.f32.partialorder %v2569, 8.507059e+37
  %v2571 = vand.u32 %v2559, 2147483648
  %v2572 = vor.u32 1.1754944e-38, %v2571
  %v2573 = vsel %vm2570, %v2572, %v2568
  %v2574 = vmul.f32 %v2549, %v2573
  %v2575 = vmin.f32 %v2574, 1.0
  %v2576 = vmax.f32 %v2575, -1.0
  %v2577 = vmul.f32 %v2054, %v2054
  %v2578 = vmin.f32 16.0, %v2577
  %v2579 = vmul.f32 %v2578, 2.1237322e-06
  %v2580 = vadd.f32 %v2579, 0.00028619796
  %v2581 = vmul.f32 %v2578, %v2580
  %v2582 = vadd.f32 %v2581, 0.0036580483
  %v2583 = vmul.f32 %v2578, %v2582
  %v2584 = vadd.f32 %v2583, 0.05243302
  %v2585 = vmul.f32 %v2578, %v2584
  %v2586 = vadd.f32 %v2585, 0.18741608
  %v2587 = vmul.f32 %v2578, %v2586
  %v2588 = vadd.f32 %v2587, 1.1283791
  %v2589 = vmul.f32 %v2054, %v2588
  %v2590 = vmul.f32 %v2578, 3.8918573e-05
  %v2591 = vadd.f32 %v2590, 0.001143296
  %v2592 = vmul.f32 %v2578, %v2591
  %v2593 = vadd.f32 %v2592, 0.014752088
  %v2594 = vmul.f32 %v2578, %v2593
  %v2595 = vadd.f32 %v2594, 0.112945676
  %v2596 = vmul.f32 %v2578, %v2595
  %v2597 = vadd.f32 %v2596, 0.4994258
  %v2598 = vmul.f32 %v2578, %v2597
  %v2599 = vadd.f32 %v2598, 1.0
  %v2600 = vrcp.pop %v2599
  %v2601 = vmul.f32 %v2599, %v2600
  %v2602 = vsub.f32 1.0, %v2601
  %v2603 = vmul.f32 %v2600, %v2602
  %v2604 = vadd.f32 %v2600, %v2603
  %vm2605 = vweird.f32 %v2599
  %vm2606 = vweird.f32 %v2600
  %vm2607 = vmor %vm2605, %vm2606
  %v2608 = vsel %vm2607, %v2600, %v2604
  %v2609 = vand.u32 2147483647, %v2599
  %vm2610 = vcmp.eq.f32.partialorder %v2609, 8.507059e+37
  %v2611 = vand.u32 %v2599, 2147483648
  %v2612 = vor.u32 1.1754944e-38, %v2611
  %v2613 = vsel %vm2610, %v2612, %v2608
  %v2614 = vmul.f32 %v2589, %v2613
  %v2615 = vmin.f32 %v2614, 1.0
  %v2616 = vmax.f32 %v2615, -1.0
  %v2617 = vmul.f32 %v2055, %v2055
  %v2618 = vmin.f32 16.0, %v2617
  %v2619 = vmul.f32 %v2618, 2.1237322e-06
  %v2620 = vadd.f32 %v2619, 0.00028619796
  %v2621 = vmul.f32 %v2618, %v2620
  %v2622 = vadd.f32 %v2621, 0.0036580483
  %v2623 = vmul.f32 %v2618, %v2622
  %v2624 = vadd.f32 %v2623, 0.05243302
  %v2625 = vmul.f32 %v2618, %v2624
  %v2626 = vadd.f32 %v2625, 0.18741608
  %v2627 = vmul.f32 %v2618, %v2626
  %v2628 = vadd.f32 %v2627, 1.1283791
  %v2629 = vmul.f32 %v2055, %v2628
  %v2630 = vmul.f32 %v2618, 3.8918573e-05
  %v2631 = vadd.f32 %v2630, 0.001143296
  %v2632 = vmul.f32 %v2618, %v2631
  %v2633 = vadd.f32 %v2632, 0.014752088
  %v2634 = vmul.f32 %v2618, %v2633
  %v2635 = vadd.f32 %v2634, 0.112945676
  %v2636 = vmul.f32 %v2618, %v2635
  %v2637 = vadd.f32 %v2636, 0.4994258
  %v2638 = vmul.f32 %v2618, %v2637
  %v2639 = vadd.f32 %v2638, 1.0
  %v2640 = vrcp.pop %v2639
  %v2641 = vmul.f32 %v2639, %v2640
  %v2642 = vsub.f32 1.0, %v2641
  %v2643 = vmul.f32 %v2640, %v2642
  %v2644 = vadd.f32 %v2640, %v2643
  %vm2645 = vweird.f32 %v2639
  %vm2646 = vweird.f32 %v2640
  %vm2647 = vmor %vm2645, %vm2646
  %v2648 = vsel %vm2647, %v2640, %v2644
  %v2649 = vand.u32 2147483647, %v2639
  %vm2650 = vcmp.eq.f32.partialorder %v2649, 8.507059e+37
  %v2651 = vand.u32 %v2639, 2147483648
  %v2652 = vor.u32 1.1754944e-38, %v2651
  %v2653 = vsel %vm2650, %v2652, %v2648
  %v2654 = vmul.f32 %v2629, %v2653
  %v2655 = vmin.f32 %v2654, 1.0
  %v2656 = vmax.f32 %v2655, -1.0
  %v2657 = vmul.f32 %v2056, %v2056
  %v2658 = vmin.f32 16.0, %v2657
  %v2659 = vmul.f32 %v2658, 2.1237322e-06
  %v2660 = vadd.f32 %v2659, 0.00028619796
  %v2661 = vmul.f32 %v2658, %v2660
  %v2662 = vadd.f32 %v2661, 0.0036580483
  %v2663 = vmul.f32 %v2658, %v2662
  %v2664 = vadd.f32 %v2663, 0.05243302
  %v2665 = vmul.f32 %v2658, %v2664
  %v2666 = vadd.f32 %v2665, 0.18741608
  %v2667 = vmul.f32 %v2658, %v2666
  %v2668 = vadd.f32 %v2667, 1.1283791
  %v2669 = vmul.f32 %v2056, %v2668
  %v2670 = vmul.f32 %v2658, 3.8918573e-05
  %v2671 = vadd.f32 %v2670, 0.001143296
  %v2672 = vmul.f32 %v2658, %v2671
  %v2673 = vadd.f32 %v2672, 0.014752088
  %v2674 = vmul.f32 %v2658, %v2673
  %v2675 = vadd.f32 %v2674, 0.112945676
  %v2676 = vmul.f32 %v2658, %v2675
  %v2677 = vadd.f32 %v2676, 0.4994258
  %v2678 = vmul.f32 %v2658, %v2677
  %v2679 = vadd.f32 %v2678, 1.0
  %v2680 = vrcp.pop %v2679
  %v2681 = vmul.f32 %v2679, %v2680
  %v2682 = vsub.f32 1.0, %v2681
  %v2683 = vmul.f32 %v2680, %v2682
  %v2684 = vadd.f32 %v2680, %v2683
  %vm2685 = vweird.f32 %v2679
  %vm2686 = vweird.f32 %v2680
  %vm2687 = vmor %vm2685, %vm2686
  %v2688 = vsel %vm2687, %v2680, %v2684
  %v2689 = vand.u32 2147483647, %v2679
  %vm2690 = vcmp.eq.f32.partialorder %v2689, 8.507059e+37
  %v2691 = vand.u32 %v2679, 2147483648
  %v2692 = vor.u32 1.1754944e-38, %v2691
  %v2693 = vsel %vm2690, %v2692, %v2688
  %v2694 = vmul.f32 %v2669, %v2693
  %v2695 = vmin.f32 %v2694, 1.0
  %v2696 = vmax.f32 %v2695, -1.0
  %v2697 = vadd.f32 %v2096, 1.0
  %v2698 = vadd.f32 %v2136, 1.0
  %v2699 = vadd.f32 %v2176, 1.0
  %v2700 = vadd.f32 %v2216, 1.0
  %v2701 = vadd.f32 %v2256, 1.0
  %v2702 = vadd.f32 %v2296, 1.0
  %v2703 = vadd.f32 %v2336, 1.0
  %v2704 = vadd.f32 %v2376, 1.0
  %v2705 = vadd.f32 %v2416, 1.0
  %v2706 = vadd.f32 %v2456, 1.0
  %v2707 = vadd.f32 %v2496, 1.0
  %v2708 = vadd.f32 %v2536, 1.0
  %v2709 = vadd.f32 %v2576, 1.0
  %v2710 = vadd.f32 %v2616, 1.0
  %v2711 = vadd.f32 %v2656, 1.0
  %v2712 = vadd.f32 %v2696, 1.0
  %v2713 = vmul.f32 %v2025, %v2697
  %v2714 = vmul.f32 %v2026, %v2698
  %v2715 = vmul.f32 %v2027, %v2699
  %v2716 = vmul.f32 %v2028, %v2700
  %v2717 = vmul.f32 %v2029, %v2701
  %v2718 = vmul.f32 %v2030, %v2702
  %v2719 = vmul.f32 %v2031, %v2703
  %v2720 = vmul.f32 %v2032, %v2704
  %v2721 = vmul.f32 %v2033, %v2705
  %v2722 = vmul.f32 %v2034, %v2706
  %v2723 = vmul.f32 %v2035, %v2707
  %v2724 = vmul.f32 %v2036, %v2708
  %v2725 = vmul.f32 %v2037, %v2709
  %v2726 = vmul.f32 %v2038, %v2710
  %v2727 = vmul.f32 %v2039, %v2711
  %v2728 = vmul.f32 %v2040, %v2712
  %v2729 = vpack.c.bf16 %v2714, %v2713
  %v2730 = vpack.c.bf16 %v2716, %v2715
  %v2731 = vpack.c.bf16 %v2718, %v2717
  %v2732 = vpack.c.bf16 %v2720, %v2719
  %v2733 = vpack.c.bf16 %v2722, %v2721
  %v2734 = vpack.c.bf16 %v2724, %v2723
  %v2735 = vpack.c.bf16 %v2726, %v2725
  %v2736 = vpack.c.bf16 %v2728, %v2727
  %v2737 = vperm.slane %v1446, 5
  %v2742 = vunpack.c.l.b16 %v1463
  %v2743 = vunpack.c.l.b16 %v1464
  %v2744 = vunpack.c.l.b16 %v1465
  %v2745 = vunpack.c.l.b16 %v1466
  %v2746 = vpack.c.b16 %v2743, %v2742
  %v2747 = vpack.c.b16 %v2745, %v2744
  %v2751 = vsel %vm75, %v2729, 0
  %v2754 = vsel %vm75, %v2730, 0
  %v2757 = vsel %vm75, %v2731, 0
  %v2760 = vsel %vm75, %v2732, 0
  %v2763 = vsel %vm75, %v2733, 0
  %v2766 = vsel %vm75, %v2734, 0
  %v2769 = vsel %vm75, %v2735, 0
  %v2772 = vsel %vm75, %v2736, 0
  %2774 = vmatpush.bf16.msra.mxu0 0
  %2775 = vmatpush.bf16.msra.mxu0 0
  %2776 = vmatpush.bf16.msra.mxu0 0
  %2777 = vmatpush.bf16.msra.mxu0 0
  %2778 = vmatpush.bf16.msra.mxu0 0
  %2779 = vmatpush.bf16.msra.mxu0 0
  %2780 = vmatpush.bf16.msra.mxu0 %v2747
  %2781 = vmatpush.bf16.msra.mxu0 %v2746
  %2782 = vmatmul.bf16.gmra.mxu0 %v2751
  %v2783 = vpop.f32.mrf.mxu0
  %v2784 = vadd.f32 %v2737, %v2783
  %v2785 = vpop.f32.mrf.mxu0
  %v2786 = vadd.f32 %v2737, %v2785
  %2787 = vmatmul.bf16.gmra.mxu0 %v2754
  %v2788 = vpop.f32.mrf.mxu0
  %v2789 = vadd.f32 %v2737, %v2788
  %v2790 = vpop.f32.mrf.mxu0
  %v2791 = vadd.f32 %v2737, %v2790
  %2792 = vmatmul.bf16.gmra.mxu0 %v2757
  %v2793 = vpop.f32.mrf.mxu0
  %v2794 = vadd.f32 %v2737, %v2793
  %v2795 = vpop.f32.mrf.mxu0
  %v2796 = vadd.f32 %v2737, %v2795
  %2797 = vmatmul.bf16.gmra.mxu0 %v2760
  %v2798 = vpop.f32.mrf.mxu0
  %v2799 = vadd.f32 %v2737, %v2798
  %v2800 = vpop.f32.mrf.mxu0
  %v2801 = vadd.f32 %v2737, %v2800
  %2802 = vmatmul.bf16.gmra.mxu0 %v2763
  %v2803 = vpop.f32.mrf.mxu0
  %v2804 = vadd.f32 %v2737, %v2803
  %v2805 = vpop.f32.mrf.mxu0
  %v2806 = vadd.f32 %v2737, %v2805
  %2807 = vmatmul.bf16.gmra.mxu0 %v2766
  %v2808 = vpop.f32.mrf.mxu0
  %v2809 = vadd.f32 %v2737, %v2808
  %v2810 = vpop.f32.mrf.mxu0
  %v2811 = vadd.f32 %v2737, %v2810
  %2812 = vmatmul.bf16.gmra.mxu0 %v2769
  %v2813 = vpop.f32.mrf.mxu0
  %v2814 = vadd.f32 %v2737, %v2813
  %v2815 = vpop.f32.mrf.mxu0
  %v2816 = vadd.f32 %v2737, %v2815
  %2817 = vmatmul.bf16.gmra.mxu0 %v2772
  %v2818 = vpop.f32.mrf.mxu0
  %v2819 = vadd.f32 %v2737, %v2818
  %v2820 = vpop.f32.mrf.mxu0
  %v2821 = vadd.f32 %v2737, %v2820
  %2822 = vdwg.mxu0
  %v2823 = vadd.f32 %v1529, %v2784
  %v2824 = vadd.f32 %v1530, %v2786
  %v2825 = vadd.f32 %v1531, %v2789
  %v2826 = vadd.f32 %v1532, %v2791
  %v2827 = vadd.f32 %v1533, %v2794
  %v2828 = vadd.f32 %v1534, %v2796
  %v2829 = vadd.f32 %v1535, %v2799
  %v2830 = vadd.f32 %v1536, %v2801
  %v2831 = vadd.f32 %v1537, %v2804
  %v2832 = vadd.f32 %v1538, %v2806
  %v2833 = vadd.f32 %v1539, %v2809
  %v2834 = vadd.f32 %v1540, %v2811
  %v2835 = vadd.f32 %v1541, %v2814
  %v2836 = vadd.f32 %v1542, %v2816
  %v2837 = vadd.f32 %v1543, %v2819
  %v2838 = vadd.f32 %v1544, %v2821
  %2839 = vst.msk [vmem:[%s7] sm:$0xff] %vm75, %v2823
  %2840 = vst.msk [vmem:[%s7 + $0x8] sm:$0xff] %vm75, %v2824
  %2841 = vst.msk [vmem:[%s7 + $0x10] sm:$0xff] %vm75, %v2825
  %2842 = vst.msk [vmem:[%s7 + $0x18] sm:$0xff] %vm75, %v2826
  %2843 = vst.msk [vmem:[%s7 + $0x20] sm:$0xff] %vm75, %v2827
  %2844 = vst.msk [vmem:[%s7 + $0x28] sm:$0xff] %vm75, %v2828
  %2845 = vst.msk [vmem:[%s7 + $0x30] sm:$0xff] %vm75, %v2829
  %2846 = vst.msk [vmem:[%s7 + $0x38] sm:$0xff] %vm75, %v2830
  %2847 = vst.msk [vmem:[%s7 + $0x40] sm:$0xff] %vm75, %v2831
  %2848 = vst.msk [vmem:[%s7 + $0x48] sm:$0xff] %vm75, %v2832
  %2849 = vst.msk [vmem:[%s7 + $0x50] sm:$0xff] %vm75, %v2833
  %2850 = vst.msk [vmem:[%s7 + $0x58] sm:$0xff] %vm75, %v2834
  %2851 = vst.msk [vmem:[%s7 + $0x60] sm:$0xff] %vm75, %v2835
  %2852 = vst.msk [vmem:[%s7 + $0x68] sm:$0xff] %vm75, %v2836
  %2853 = vst.msk [vmem:[%s7 + $0x70] sm:$0xff] %vm75, %v2837
  %2854 = vst.msk [vmem:[%s7 + $0x78] sm:$0xff] %vm75, %v2838
  // Predicated region
  $region30: #{tpu_custom_call.1} parent=0 // pred_check
    _
  $region31: #{tpu_custom_call.1} parent=0 // pred_check_branch
    %2856 = sbr.rel (0) target = $region33
  $region32: #{tpu_custom_call.1} parent=0 // pred_region
    _
  $region33: #{tpu_custom_call.1} parent=0 // pred_fallthru
    _
  // Predicated region
  $region34: #{tpu_custom_call.1} parent=0 // pred_check
    _
  $region35: #{tpu_custom_call.1} parent=0 // pred_check_branch
    %2858 = sbr.rel (0) target = $region37
  $region36: #{tpu_custom_call.1} parent=0 // pred_region
    _
  $region37: #{tpu_custom_call.1} parent=0 // pred_fallthru
    _

</llo_original>
